<compile_context>
chip_gen: v6e
topology: v6e:2x2x1
jax: 0.10.0
libtpu: 0.0.40
codegen_flags: <defaults>
</compile_context>

<pallas_src>
import jax
import jax.numpy as jnp
from jax import lax
from jax.experimental import pallas as pl
from jax.experimental.pallas import tpu as pltpu

BN_EPS = 1e-5


def make_seg_decoder_kernel(per_batch_store: bool):
    def kernel(patches_ref, w1_ref, gamma_ref, beta_ref, w2_ref, b2_ref, out_ref):
        # patches_ref: (9*Cin, N*HW) bf16   im2col, lane-dense spatial axis
        # w1_ref:      (Cmid, 9*Cin) bf16   conv1 weight, tap-major / cin-minor K order
        # gamma/beta:  (Cmid, 1) f32
        # w2_ref:      (num_classes, Cmid) bf16
        # b2_ref:      (num_classes, 1) f32
        # out_ref:     (N, num_classes, HW) or (num_classes, N*HW), f32
        NHW = patches_ref.shape[1]

        # ---- conv1 (bias-free: cancelled by training-mode BN): one MXU matmul ----
        acc = jnp.dot(w1_ref[...], patches_ref[...],
                      preferred_element_type=jnp.float32)        # (Cmid, NHW) f32

        # ---- BatchNorm2d batch stats, uncentered single-read formulation, f32 ----
        inv_n = 1.0 / float(NHW)
        s = jnp.sum(acc, axis=1, keepdims=True)                   # (Cmid, 1)
        ss = jnp.sum(acc * acc, axis=1, keepdims=True)            # (Cmid, 1)
        mean = s * inv_n
        var = jnp.maximum(ss * inv_n - mean * mean, 0.0)
        scale = gamma_ref[...] * lax.rsqrt(var + BN_EPS)          # (Cmid, 1)
        shift = beta_ref[...] - mean * scale                      # (Cmid, 1)

        # ---- fused BN-apply + ReLU + bf16 downcast: single pass over acc ----
        y = jnp.maximum(acc * scale + shift, 0.0).astype(jnp.bfloat16)

        # ---- conv2 (1x1), transposed so the result dim is lane-dense ----
        out2 = jnp.dot(w2_ref[...], y,
                       preferred_element_type=jnp.float32) + b2_ref[...]

        if per_batch_store:
            # HW % 128 == 0: unmasked lane-dense (num_classes, HW) slabs, NCHW directly.
            N, _, HW = out_ref.shape
            for n in range(N):
                out_ref[n] = out2[:, n * HW:(n + 1) * HW].astype(out_ref.dtype)
        else:
            # General shapes: one lane-dense (num_classes, N*HW) slab; wrapper transposes.
            out_ref[...] = out2.astype(out_ref.dtype)

    return kernel


def segmentation_decoder(x_nchw, params):
    """Forward pass matching PyTorch SegmentationDecoder (training-mode BN)."""
    w1, b1, gamma, beta, w2, b2 = params                  # b1 unused: cancelled by BN
    del b1
    N, Cin, H, W = x_nchw.shape
    Cmid = w1.shape[0]
    num_classes = w2.shape[0]
    HW = H * W

    # im2col in bf16, channel-major so the result is natively (9*Cin, N*HW):
    # K index = (dy*3 + dx)*Cin + cin, free index = n*HW + h*W + w.
    xt = jnp.transpose(x_nchw, (1, 0, 2, 3)).astype(jnp.bfloat16)     # (Cin, N, H, W), tiny
    xp = jnp.pad(xt, ((0, 0), (0, 0), (1, 1), (1, 1)))
    slabs = [xp[:, :, dy:dy + H, dx:dx + W] for dy in range(3) for dx in range(3)]
    pat = jnp.stack(slabs, axis=0).reshape(9 * Cin, N * HW)           # (9*Cin, N*HW) bf16

    # conv1 weight OIHW -> (Cmid, 9*Cin) with matching (tap, cin) K ordering, bf16.
    w1m = jnp.transpose(w1, (0, 2, 3, 1)).reshape(Cmid, 9 * Cin).astype(jnp.bfloat16)
    w2b = w2.astype(jnp.bfloat16)                                     # (num_classes, Cmid)

    per_batch = (HW % 128 == 0)
    if per_batch:
        out_shape = jax.ShapeDtypeStruct((N, num_classes, HW), jnp.float32)
    else:
        out_shape = jax.ShapeDtypeStruct((num_classes, N * HW), jnp.float32)

    vmem = pl.BlockSpec(memory_space=pltpu.MemorySpace.VMEM)
    out = pl.pallas_call(
        make_seg_decoder_kernel(per_batch),
        out_shape=out_shape,
        in_specs=[vmem] * 6,
        out_specs=vmem,
    )(pat, w1m,
      gamma.reshape(Cmid, 1).astype(jnp.float32),
      beta.reshape(Cmid, 1).astype(jnp.float32),
      w2b,
      b2.reshape(num_classes, 1).astype(jnp.float32))

    if per_batch:
        return out.reshape(N, num_classes, H, W)          # already NCHW-ordered
    return out.reshape(num_classes, N, H, W).transpose(1, 0, 2, 3)


def init_params(key, in_channels, num_classes, c_mid=256):
    k1, k2, k3, k4, k5, k6 = jax.random.split(key, 6)
    w1 = jax.random.normal(k1, (c_mid, in_channels, 3, 3), jnp.float32) * 0.05  # OIHW
    b1 = jax.random.normal(k2, (c_mid,), jnp.float32) * 0.05
    gamma = 1.0 + jax.random.normal(k3, (c_mid,), jnp.float32) * 0.05
    beta = jax.random.normal(k4, (c_mid,), jnp.float32) * 0.05
    w2 = jax.random.normal(k5, (num_classes, c_mid), jnp.float32) * 0.05        # 1x1 conv
    b2 = jax.random.normal(k6, (num_classes,), jnp.float32) * 0.05
    return (w1, b1, gamma, beta, w2, b2)


def reference_jax(x_nchw, params):
    """Pure-JAX/XLA reference of the same forward pass (includes conv1 bias)."""
    w1, b1, gamma, beta, w2, b2 = params
    x = x_nchw.astype(jnp.float32)
    y = lax.conv_general_dilated(
        x, w1, window_strides=(1, 1), padding='SAME',
        dimension_numbers=('NCHW', 'OIHW', 'NCHW')) + b1.reshape(1, -1, 1, 1)
    mean = jnp.mean(y, axis=(0, 2, 3), keepdims=True)
    var = jnp.mean((y - mean) ** 2, axis=(0, 2, 3), keepdims=True)
    y = (y - mean) * lax.rsqrt(var + BN_EPS)
    y = y * gamma.reshape(1, -1, 1, 1) + beta.reshape(1, -1, 1, 1)
    y = jnp.maximum(y, 0.0)
    out = jnp.einsum('nchw,kc->nkhw', y, w2) + b2.reshape(1, -1, 1, 1)
    return out


if __name__ == "__main__":
    key = jax.random.PRNGKey(0)
    kx, kp = jax.random.split(key)

    N, C_IN, H, W = 2, 4, 16, 16
    NUM_CLASSES = 8

    x = jax.random.normal(kx, (N, C_IN, H, W), jnp.float32)
    params = init_params(kp, C_IN, NUM_CLASSES)

    fwd = jax.jit(segmentation_decoder)
    out = jax.block_until_ready(fwd(x, params))
    assert out.shape == (N, NUM_CLASSES, H, W)

    ref = jax.block_until_ready(reference_jax(x, params))
    max_err = jnp.max(jnp.abs(out - ref))
    assert jnp.allclose(out, ref, atol=3e-2, rtol=3e-2), f"max abs err {max_err}"

    print("KERNEL_OK")
</pallas_src>

<mosaic_0001>
module attributes {stable_mosaic.version = 11 : i64} {
  func.func @kernel(%arg0: memref<36x512xbf16, #tpu.memory_space<vmem>>, %arg1: memref<256x36xbf16, #tpu.memory_space<vmem>>, %arg2: memref<256x1xf32, #tpu.memory_space<vmem>>, %arg3: memref<256x1xf32, #tpu.memory_space<vmem>>, %arg4: memref<8x256xbf16, #tpu.memory_space<vmem>>, %arg5: memref<8x1xf32, #tpu.memory_space<vmem>>, %arg6: memref<2x8x256xf32, #tpu.memory_space<vmem>>) attributes {dimension_semantics = [], scalar_prefetch = 0 : i64, scratch_operands = 0 : i64, tpu.core_type = #tpu.core_type<tc>} {
    %c0 = arith.constant 0 : index
    %c0_0 = arith.constant 0 : index
    %0 = vector.load %arg1[%c0, %c0_0] : memref<256x36xbf16, #tpu.memory_space<vmem>>, vector<256x36xbf16>
    %c0_1 = arith.constant 0 : index
    %c0_2 = arith.constant 0 : index
    %1 = vector.load %arg0[%c0_1, %c0_2] : memref<36x512xbf16, #tpu.memory_space<vmem>>, vector<36x512xbf16>
    %cst = arith.constant dense<0.000000e+00> : vector<256x512xf32>
    %2 = tpu.matmul %0, %1, %cst {dimension_numbers = #tpu.dot_dimension_numbers<[1], [0], [0], [1], [0, 0, 1, 1], [], []>} : vector<256x36xbf16>, vector<36x512xbf16>, vector<256x512xf32> -> vector<256x512xf32>
    %cst_3 = arith.constant dense<0.000000e+00> : vector<256xf32>
    %3 = vector.multi_reduction <add>, %2, %cst_3 [1] : vector<256x512xf32> to vector<256xf32>
    %4 = vector.shape_cast %3 : vector<256xf32> to vector<256x1xf32>
    %5 = arith.mulf %2, %2 : vector<256x512xf32>
    %cst_4 = arith.constant dense<0.000000e+00> : vector<256xf32>
    %6 = vector.multi_reduction <add>, %5, %cst_4 [1] : vector<256x512xf32> to vector<256xf32>
    %7 = vector.shape_cast %6 : vector<256xf32> to vector<256x1xf32>
    %cst_5 = arith.constant 0.001953125 : f32
    %8 = vector.broadcast %cst_5 : f32 to vector<256x1xf32>
    %9 = arith.mulf %4, %8 : vector<256x1xf32>
    %cst_6 = arith.constant 0.001953125 : f32
    %10 = vector.broadcast %cst_6 : f32 to vector<256x1xf32>
    %11 = arith.mulf %7, %10 : vector<256x1xf32>
    %12 = arith.mulf %9, %9 : vector<256x1xf32>
    %13 = arith.subf %11, %12 : vector<256x1xf32>
    %cst_7 = arith.constant 0.000000e+00 : f32
    %14 = vector.broadcast %cst_7 : f32 to vector<256x1xf32>
    %15 = arith.maximumf %13, %14 : vector<256x1xf32>
    %c0_8 = arith.constant 0 : index
    %c0_9 = arith.constant 0 : index
    %16 = vector.load %arg2[%c0_8, %c0_9] : memref<256x1xf32, #tpu.memory_space<vmem>>, vector<256x1xf32>
    %cst_10 = arith.constant 9.99999974E-6 : f32
    %17 = vector.broadcast %cst_10 : f32 to vector<256x1xf32>
    %18 = arith.addf %15, %17 : vector<256x1xf32>
    %19 = math.rsqrt %18 : vector<256x1xf32>
    %20 = arith.mulf %16, %19 : vector<256x1xf32>
    %c0_11 = arith.constant 0 : index
    %c0_12 = arith.constant 0 : index
    %21 = vector.load %arg3[%c0_11, %c0_12] : memref<256x1xf32, #tpu.memory_space<vmem>>, vector<256x1xf32>
    %22 = arith.mulf %9, %20 : vector<256x1xf32>
    %23 = arith.subf %21, %22 : vector<256x1xf32>
    %24 = vector.broadcast %20 : vector<256x1xf32> to vector<256x512xf32>
    %25 = arith.mulf %2, %24 : vector<256x512xf32>
    %26 = vector.broadcast %23 : vector<256x1xf32> to vector<256x512xf32>
    %27 = arith.addf %25, %26 : vector<256x512xf32>
    %cst_13 = arith.constant 0.000000e+00 : f32
    %28 = vector.broadcast %cst_13 : f32 to vector<256x512xf32>
    %29 = arith.maximumf %27, %28 : vector<256x512xf32>
    %30 = arith.truncf %29 : vector<256x512xf32> to vector<256x512xbf16>
    %c0_14 = arith.constant 0 : index
    %c0_15 = arith.constant 0 : index
    %31 = vector.load %arg4[%c0_14, %c0_15] : memref<8x256xbf16, #tpu.memory_space<vmem>>, vector<8x256xbf16>
    %cst_16 = arith.constant dense<0.000000e+00> : vector<8x512xf32>
    %32 = tpu.matmul %31, %30, %cst_16 {dimension_numbers = #tpu.dot_dimension_numbers<[1], [0], [0], [1], [0, 0, 1, 1], [], []>} : vector<8x256xbf16>, vector<256x512xbf16>, vector<8x512xf32> -> vector<8x512xf32>
    %c0_17 = arith.constant 0 : index
    %c0_18 = arith.constant 0 : index
    %33 = vector.load %arg5[%c0_17, %c0_18] : memref<8x1xf32, #tpu.memory_space<vmem>>, vector<8x1xf32>
    %34 = vector.broadcast %33 : vector<8x1xf32> to vector<8x512xf32>
    %35 = arith.addf %32, %34 : vector<8x512xf32>
    %36 = vector.extract_strided_slice %35 {offsets = [0, 0], sizes = [8, 256], strides = [1, 1]} : vector<8x512xf32> to vector<8x256xf32>
    %c0_19 = arith.constant 0 : index
    %c0_20 = arith.constant 0 : index
    %c0_21 = arith.constant 0 : index
    %37 = vector.load %arg6[%c0_19, %c0_20, %c0_21] : memref<2x8x256xf32, #tpu.memory_space<vmem>>, vector<1x8x256xf32>
    %38 = vector.shape_cast %37 : vector<1x8x256xf32> to vector<8x256xf32>
    %39 = vector.shape_cast %36 : vector<8x256xf32> to vector<1x8x256xf32>
    tpu.vector_store %arg6[%c0_19, %c0_20, %c0_21], %39 {strides = array<i32>} : memref<2x8x256xf32, #tpu.memory_space<vmem>>, vector<1x8x256xf32>,
    %40 = vector.extract_strided_slice %35 {offsets = [0, 256], sizes = [8, 256], strides = [1, 1]} : vector<8x512xf32> to vector<8x256xf32>
    %c1 = arith.constant 1 : index
    %c0_22 = arith.constant 0 : index
    %c0_23 = arith.constant 0 : index
    %41 = vector.load %arg6[%c1, %c0_22, %c0_23] : memref<2x8x256xf32, #tpu.memory_space<vmem>>, vector<1x8x256xf32>
    %42 = vector.shape_cast %41 : vector<1x8x256xf32> to vector<8x256xf32>
    %43 = vector.shape_cast %40 : vector<8x256xf32> to vector<1x8x256xf32>
    tpu.vector_store %arg6[%c1, %c0_22, %c0_23], %43 {strides = array<i32>} : memref<2x8x256xf32, #tpu.memory_space<vmem>>, vector<1x8x256xf32>,
    return
  }
}

</mosaic_0001>

<llo_original>
// kernel: segmentation_decoder.1
$region0: #{segmentation_decoder.1}
  #allocation0 [shape = 'u32[]', space=smem, size = 0x4, offset = 0x4, fixed_abs, tag = 'smem constant byte address 0x4 - core index']
  #allocation1 [shape = 'u32[144,128]{1,0:T(1,128)}', space=vmem, size = 0x12000, scoped, tag = 'internal scratch']
  %s0 = inlined_call_operand.vmem [shape: bf16[36,512], index: 0, kind: input, shape index: {}]
  %s1 = inlined_call_operand.vmem [shape: bf16[256,36], index: 1, kind: input, shape index: {}]
  %s2 = inlined_call_operand.vmem [shape: f32[256,1], index: 2, kind: input, shape index: {}]
  %s3 = inlined_call_operand.vmem [shape: f32[256,1], index: 3, kind: input, shape index: {}]
  %s4 = inlined_call_operand.vmem [shape: bf16[8,256], index: 4, kind: input, shape index: {}]
  %s5 = inlined_call_operand.vmem [shape: f32[8,1], index: 5, kind: input, shape index: {}]
  %s6 = inlined_call_operand.vmem [shape: f32[2,8,256], index: 6, kind: output, shape index: {}]
  %s7 = sld [smem:[#allocation0]]
  $region34: #{segmentation_decoder.1} parent=0
    _
  %s9 = ssub.s32 1, %s7
  %s10 = scalar_select 0, %s9, %s7
  // Predicated region
  $region2: #{segmentation_decoder.1} parent=0 // pred_check
    _
  $region3: #{segmentation_decoder.1} parent=0 // pred_check_branch
    %12 = sbr.rel (0) target = $region5
  $region4: #{segmentation_decoder.1} parent=0 // pred_region
    _
  $region5: #{segmentation_decoder.1} parent=0 // pred_fallthru
    _
  // Predicated region
  $region6: #{segmentation_decoder.1} parent=0 // pred_check
    _
  $region7: #{segmentation_decoder.1} parent=0 // pred_check_branch
    %14 = sbr.rel (0) target = $region9
  $region8: #{segmentation_decoder.1} parent=0 // pred_region
    _
  $region9: #{segmentation_decoder.1} parent=0 // pred_fallthru
    _
  // Predicated region
  $region10: #{segmentation_decoder.1} parent=0 // pred_check
    _
  $region11: #{segmentation_decoder.1} parent=0 // pred_check_branch
    %16 = sbr.rel (0) target = $region13
  $region12: #{segmentation_decoder.1} parent=0 // pred_region
    _
  $region13: #{segmentation_decoder.1} parent=0 // pred_fallthru
    _
  // Predicated region
  $region14: #{segmentation_decoder.1} parent=0 // pred_check
    _
  $region15: #{segmentation_decoder.1} parent=0 // pred_check_branch
    %18 = sbr.rel (0) target = $region17
  $region16: #{segmentation_decoder.1} parent=0 // pred_region
    _
  $region17: #{segmentation_decoder.1} parent=0 // pred_fallthru
    _
  // Predicated region
  $region18: #{segmentation_decoder.1} parent=0 // pred_check
    _
  $region19: #{segmentation_decoder.1} parent=0 // pred_check_branch
    %20 = sbr.rel (0) target = $region21
  $region20: #{segmentation_decoder.1} parent=0 // pred_region
    _
  $region21: #{segmentation_decoder.1} parent=0 // pred_fallthru
    _
  // Predicated region
  $region22: #{segmentation_decoder.1} parent=0 // pred_check
    _
  $region23: #{segmentation_decoder.1} parent=0 // pred_check_branch
    %22 = sbr.rel (0) target = $region25
  $region24: #{segmentation_decoder.1} parent=0 // pred_region
    _
  $region25: #{segmentation_decoder.1} parent=0 // pred_fallthru
    _
  %v24 = vld [vmem:[%s1] sm:$0xf]
  %v25 = vld [vmem:[%s1 + $0x4] sm:$0xf]
  %v26 = vld [vmem:[%s1 + $0x8] sm:$0xf]
  %v27 = vld [vmem:[%s1 + $0xc] sm:$0xf]
  %v28 = vld [vmem:[%s1 + $0x10] sm:$0xf]
  %v29 = vld [vmem:[%s1 + $0x14] sm:$0xf]
  %v30 = vld [vmem:[%s1 + $0x18] sm:$0xf]
  %v31 = vld [vmem:[%s1 + $0x1c] sm:$0xf]
  %v32 = vld [vmem:[%s1 + $0x20] sm:$0xf]
  %v33 = vld [vmem:[%s1 + $0x24] sm:$0xf]
  %v34 = vld [vmem:[%s1 + $0x28] sm:$0xf]
  %v35 = vld [vmem:[%s1 + $0x2c] sm:$0xf]
  %v36 = vld [vmem:[%s1 + $0x30] sm:$0xf]
  %v37 = vld [vmem:[%s1 + $0x34] sm:$0xf]
  %v38 = vld [vmem:[%s1 + $0x38] sm:$0xf]
  %v39 = vld [vmem:[%s1 + $0x3c] sm:$0xf]
  %v40 = vld [vmem:[%s1 + $0x40] sm:$0xf]
  %v41 = vld [vmem:[%s1 + $0x44] sm:$0xf]
  %v42 = vld [vmem:[%s1 + $0x48] sm:$0xf]
  %v43 = vld [vmem:[%s1 + $0x4c] sm:$0xf]
  %v44 = vld [vmem:[%s1 + $0x50] sm:$0xf]
  %v45 = vld [vmem:[%s1 + $0x54] sm:$0xf]
  %v46 = vld [vmem:[%s1 + $0x58] sm:$0xf]
  %v47 = vld [vmem:[%s1 + $0x5c] sm:$0xf]
  %v48 = vld [vmem:[%s1 + $0x60] sm:$0xf]
  %v49 = vld [vmem:[%s1 + $0x64] sm:$0xf]
  %v50 = vld [vmem:[%s1 + $0x68] sm:$0xf]
  %v51 = vld [vmem:[%s1 + $0x6c] sm:$0xf]
  %v52 = vld [vmem:[%s1 + $0x70] sm:$0xf]
  %v53 = vld [vmem:[%s1 + $0x74] sm:$0xf]
  %v54 = vld [vmem:[%s1 + $0x78] sm:$0xf]
  %v55 = vld [vmem:[%s1 + $0x7c] sm:$0xf]
  %v56 = vld [vmem:[%s0] sm:$0xff]
  %v57 = vld [vmem:[%s0 + $0x8] sm:$0xff]
  %v58 = vld [vmem:[%s0 + $0x10] sm:$0xff]
  %v59 = vld [vmem:[%s0 + $0x18] sm:$0xff]
  %v60 = vld [vmem:[%s0 + $0x20] sm:$0xff]
  %v61 = vld [vmem:[%s0 + $0x28] sm:$0xff]
  %v62 = vld [vmem:[%s0 + $0x30] sm:$0xff]
  %v63 = vld [vmem:[%s0 + $0x38] sm:$0xff]
  %v64 = vld [vmem:[%s0 + $0x40] sm:$0x33]
  %v65 = vld [vmem:[%s0 + $0x48] sm:$0x33]
  %v98 = vunpack.c.l.b16 %v24
  %v99 = vunpack.c.l.b16 %v25
  %v100 = vunpack.c.l.b16 %v26
  %v101 = vunpack.c.l.b16 %v27
  %v102 = vunpack.c.l.b16 %v28
  %v103 = vunpack.c.l.b16 %v29
  %v104 = vunpack.c.l.b16 %v30
  %v105 = vunpack.c.l.b16 %v31
  %v106 = vunpack.c.l.b16 %v32
  %v107 = vunpack.c.l.b16 %v33
  %v108 = vunpack.c.l.b16 %v34
  %v109 = vunpack.c.l.b16 %v35
  %v110 = vunpack.c.l.b16 %v36
  %v111 = vunpack.c.l.b16 %v37
  %v112 = vunpack.c.l.b16 %v38
  %v113 = vunpack.c.l.b16 %v39
  %v114 = vunpack.c.l.b16 %v40
  %v115 = vunpack.c.l.b16 %v41
  %v116 = vunpack.c.l.b16 %v42
  %v117 = vunpack.c.l.b16 %v43
  %v118 = vunpack.c.l.b16 %v44
  %v119 = vunpack.c.l.b16 %v45
  %v120 = vunpack.c.l.b16 %v46
  %v121 = vunpack.c.l.b16 %v47
  %v122 = vunpack.c.l.b16 %v48
  %v123 = vunpack.c.l.b16 %v49
  %v124 = vunpack.c.l.b16 %v50
  %v125 = vunpack.c.l.b16 %v51
  %v126 = vunpack.c.l.b16 %v52
  %v127 = vunpack.c.l.b16 %v53
  %v128 = vunpack.c.l.b16 %v54
  %v129 = vunpack.c.l.b16 %v55
  %v130 = vpack.c.b16 %v99, %v98
  %v131 = vpack.c.b16 %v101, %v100
  %v132 = vpack.c.b16 %v103, %v102
  %v133 = vpack.c.b16 %v105, %v104
  %v134 = vpack.c.b16 %v107, %v106
  %v135 = vpack.c.b16 %v109, %v108
  %v136 = vpack.c.b16 %v111, %v110
  %v137 = vpack.c.b16 %v113, %v112
  %v138 = vpack.c.b16 %v115, %v114
  %v139 = vpack.c.b16 %v117, %v116
  %v140 = vpack.c.b16 %v119, %v118
  %v141 = vpack.c.b16 %v121, %v120
  %v142 = vpack.c.b16 %v123, %v122
  %v143 = vpack.c.b16 %v125, %v124
  %v144 = vpack.c.b16 %v127, %v126
  %v145 = vpack.c.b16 %v129, %v128
  %v156 = vunpack.c.l.b16 %v56
  %v157 = vunpack.c.h.b16 %v56
  %v158 = vunpack.c.l.b16 %v57
  %v159 = vunpack.c.h.b16 %v57
  %v160 = vunpack.c.l.b16 %v58
  %v161 = vunpack.c.h.b16 %v58
  %v162 = vunpack.c.l.b16 %v59
  %v163 = vunpack.c.h.b16 %v59
  %v164 = vunpack.c.l.b16 %v60
  %v165 = vunpack.c.h.b16 %v60
  %v166 = vunpack.c.l.b16 %v61
  %v167 = vunpack.c.h.b16 %v61
  %v168 = vunpack.c.l.b16 %v62
  %v169 = vunpack.c.h.b16 %v62
  %v170 = vunpack.c.l.b16 %v63
  %v171 = vunpack.c.h.b16 %v63
  %v172 = vunpack.c.l.b16 %v64
  %v173 = vunpack.c.h.b16 %v64
  %v174 = vunpack.c.l.b16 %v65
  %v175 = vunpack.c.h.b16 %v65
  %v176 = vpack.c.b16 %v160, %v156
  %v177 = vpack.c.b16 %v161, %v157
  %v178 = vpack.c.b16 %v162, %v158
  %v179 = vpack.c.b16 %v163, %v159
  %v180 = vpack.c.b16 %v168, %v164
  %v181 = vpack.c.b16 %v169, %v165
  %v182 = vpack.c.b16 %v170, %v166
  %v183 = vpack.c.b16 %v171, %v167
  %v184 = vpack.c.b16 %v172, %v172
  %v185 = vpack.c.b16 %v173, %v173
  %v186 = vpack.c.b16 %v174, %v174
  %v187 = vpack.c.b16 %v175, %v175
  %vm196 = vcmask 293888
  %v198 = vsel %vm196, %v130, 0
  %v201 = vsel %vm196, %v131, 0
  %v204 = vsel %vm196, %v132, 0
  %v207 = vsel %vm196, %v133, 0
  %v210 = vsel %vm196, %v134, 0
  %v213 = vsel %vm196, %v135, 0
  %v216 = vsel %vm196, %v136, 0
  %v219 = vsel %vm196, %v137, 0
  %v222 = vsel %vm196, %v138, 0
  %v225 = vsel %vm196, %v139, 0
  %v228 = vsel %vm196, %v140, 0
  %v231 = vsel %vm196, %v141, 0
  %v234 = vsel %vm196, %v142, 0
  %v237 = vsel %vm196, %v143, 0
  %v240 = vsel %vm196, %v144, 0
  %v243 = vsel %vm196, %v145, 0
  %vm245 = vcmask 1041408
  %v247 = vsel %vm245, %v184, 0
  %v250 = vsel %vm245, %v185, 0
  %v253 = vsel %vm245, %v186, 0
  %v256 = vsel %vm245, %v187, 0
  %258 = vmatprep.subr.bf16.mxu0 0
  %259 = vmatpush1.bf16.msra.mxu0 0
  %260 = vmatprep.subr.bf16.mxu0 0
  %261 = vmatpush1.bf16.msra.mxu0 0
  %262 = vmatprep.subr.bf16.mxu0 0
  %263 = vmatpush1.bf16.msra.mxu0 0
  %264 = vmatprep.subr.bf16.mxu0 0
  %265 = vmatpush1.bf16.msra.mxu0 0
  %266 = vmatprep.subr.bf16.mxu0 0
  %267 = vmatpush1.bf16.msra.mxu0 0
  %268 = vmatprep.subr.bf16.mxu0 %v250
  %269 = vmatpush1.bf16.msra.mxu0 %v247
  %270 = vmatprep.subr.bf16.mxu0 %v181
  %271 = vmatpush1.bf16.msra.mxu0 %v180
  %272 = vmatprep.subr.bf16.mxu0 %v177
  %273 = vmatpush1.bf16.msra.mxu0 %v176
  %274 = vmatprep.subr.bf16.mxu0 0
  %275 = vmatpush2.bf16.msra.mxu0 0
  %276 = vmatprep.subr.bf16.mxu0 0
  %277 = vmatpush2.bf16.msra.mxu0 0
  %278 = vmatprep.subr.bf16.mxu0 0
  %279 = vmatpush2.bf16.msra.mxu0 0
  %280 = vmatprep.subr.bf16.mxu0 0
  %281 = vmatpush2.bf16.msra.mxu0 0
  %282 = vmatprep.subr.bf16.mxu0 0
  %283 = vmatpush2.bf16.msra.mxu0 0
  %284 = vmatprep.subr.bf16.mxu0 0
  %285 = vmatpush2.bf16.msra.mxu0 0
  %286 = vmatprep.subr.bf16.mxu0 0
  %287 = vmatpush2.bf16.msra.mxu0 0
  %288 = vmatprep.subr.bf16.mxu0 0
  %289 = vmatpush2.bf16.msra.mxu0 0
  %290 = vmatprep.mubr.bf16.mxu0 0
  %291 = vmatmul.mubr.bf16.gmra.mxu0 %v198
  %v292 = vpop.f32.mrf.mxu0
  %v293 = vadd.f32 0.0, %v292
  %v294 = vpop.f32.mrf.mxu0
  %v295 = vadd.f32 0.0, %v294
  %v296 = vpop.f32.mrf.mxu0
  %v297 = vadd.f32 0.0, %v296
  %v298 = vpop.f32.mrf.mxu0
  %v299 = vadd.f32 0.0, %v298
  %300 = vmatprep.mubr.bf16.mxu0 0
  %301 = vmatmul.mubr.bf16.gmra.mxu0 %v201
  %v302 = vpop.f32.mrf.mxu0
  %v303 = vadd.f32 0.0, %v302
  %v304 = vpop.f32.mrf.mxu0
  %v305 = vadd.f32 0.0, %v304
  %v306 = vpop.f32.mrf.mxu0
  %v307 = vadd.f32 0.0, %v306
  %v308 = vpop.f32.mrf.mxu0
  %v309 = vadd.f32 0.0, %v308
  %310 = vmatprep.mubr.bf16.mxu0 0
  %311 = vmatmul.mubr.bf16.gmra.mxu0 %v204
  %v312 = vpop.f32.mrf.mxu0
  %v313 = vadd.f32 0.0, %v312
  %v314 = vpop.f32.mrf.mxu0
  %v315 = vadd.f32 0.0, %v314
  %v316 = vpop.f32.mrf.mxu0
  %v317 = vadd.f32 0.0, %v316
  %v318 = vpop.f32.mrf.mxu0
  %v319 = vadd.f32 0.0, %v318
  %320 = vmatprep.mubr.bf16.mxu0 0
  %321 = vmatmul.mubr.bf16.gmra.mxu0 %v207
  %v322 = vpop.f32.mrf.mxu0
  %v323 = vadd.f32 0.0, %v322
  %v324 = vpop.f32.mrf.mxu0
  %v325 = vadd.f32 0.0, %v324
  %v326 = vpop.f32.mrf.mxu0
  %v327 = vadd.f32 0.0, %v326
  %v328 = vpop.f32.mrf.mxu0
  %v329 = vadd.f32 0.0, %v328
  %330 = vmatprep.mubr.bf16.mxu0 0
  %331 = vmatmul.mubr.bf16.gmra.mxu0 %v210
  %v332 = vpop.f32.mrf.mxu0
  %v333 = vadd.f32 0.0, %v332
  %v334 = vpop.f32.mrf.mxu0
  %v335 = vadd.f32 0.0, %v334
  %v336 = vpop.f32.mrf.mxu0
  %v337 = vadd.f32 0.0, %v336
  %v338 = vpop.f32.mrf.mxu0
  %v339 = vadd.f32 0.0, %v338
  %340 = vmatprep.mubr.bf16.mxu0 0
  %341 = vmatmul.mubr.bf16.gmra.mxu0 %v213
  %v342 = vpop.f32.mrf.mxu0
  %v343 = vadd.f32 0.0, %v342
  %v344 = vpop.f32.mrf.mxu0
  %v345 = vadd.f32 0.0, %v344
  %v346 = vpop.f32.mrf.mxu0
  %v347 = vadd.f32 0.0, %v346
  %v348 = vpop.f32.mrf.mxu0
  %v349 = vadd.f32 0.0, %v348
  %350 = vmatprep.mubr.bf16.mxu0 0
  %351 = vmatmul.mubr.bf16.gmra.mxu0 %v216
  %v352 = vpop.f32.mrf.mxu0
  %v353 = vadd.f32 0.0, %v352
  %v354 = vpop.f32.mrf.mxu0
  %v355 = vadd.f32 0.0, %v354
  %v356 = vpop.f32.mrf.mxu0
  %v357 = vadd.f32 0.0, %v356
  %v358 = vpop.f32.mrf.mxu0
  %v359 = vadd.f32 0.0, %v358
  %360 = vmatprep.mubr.bf16.mxu0 0
  %361 = vmatmul.mubr.bf16.gmra.mxu0 %v219
  %v362 = vpop.f32.mrf.mxu0
  %v363 = vadd.f32 0.0, %v362
  %v364 = vpop.f32.mrf.mxu0
  %v365 = vadd.f32 0.0, %v364
  %v366 = vpop.f32.mrf.mxu0
  %v367 = vadd.f32 0.0, %v366
  %v368 = vpop.f32.mrf.mxu0
  %v369 = vadd.f32 0.0, %v368
  %370 = vmatprep.mubr.bf16.mxu0 0
  %371 = vmatmul.mubr.bf16.gmra.mxu0 %v222
  %v372 = vpop.f32.mrf.mxu0
  %v373 = vadd.f32 0.0, %v372
  %v374 = vpop.f32.mrf.mxu0
  %v375 = vadd.f32 0.0, %v374
  %v376 = vpop.f32.mrf.mxu0
  %v377 = vadd.f32 0.0, %v376
  %v378 = vpop.f32.mrf.mxu0
  %v379 = vadd.f32 0.0, %v378
  %380 = vmatprep.mubr.bf16.mxu0 0
  %381 = vmatmul.mubr.bf16.gmra.mxu0 %v225
  %v382 = vpop.f32.mrf.mxu0
  %v383 = vadd.f32 0.0, %v382
  %v384 = vpop.f32.mrf.mxu0
  %v385 = vadd.f32 0.0, %v384
  %v386 = vpop.f32.mrf.mxu0
  %v387 = vadd.f32 0.0, %v386
  %v388 = vpop.f32.mrf.mxu0
  %v389 = vadd.f32 0.0, %v388
  %390 = vmatprep.mubr.bf16.mxu0 0
  %391 = vmatmul.mubr.bf16.gmra.mxu0 %v228
  %v392 = vpop.f32.mrf.mxu0
  %v393 = vadd.f32 0.0, %v392
  %v394 = vpop.f32.mrf.mxu0
  %v395 = vadd.f32 0.0, %v394
  %v396 = vpop.f32.mrf.mxu0
  %v397 = vadd.f32 0.0, %v396
  %v398 = vpop.f32.mrf.mxu0
  %v399 = vadd.f32 0.0, %v398
  %400 = vmatprep.mubr.bf16.mxu0 0
  %401 = vmatmul.mubr.bf16.gmra.mxu0 %v231
  %v402 = vpop.f32.mrf.mxu0
  %v403 = vadd.f32 0.0, %v402
  %v404 = vpop.f32.mrf.mxu0
  %v405 = vadd.f32 0.0, %v404
  %v406 = vpop.f32.mrf.mxu0
  %v407 = vadd.f32 0.0, %v406
  %v408 = vpop.f32.mrf.mxu0
  %v409 = vadd.f32 0.0, %v408
  %410 = vmatprep.mubr.bf16.mxu0 0
  %411 = vmatmul.mubr.bf16.gmra.mxu0 %v234
  %v412 = vpop.f32.mrf.mxu0
  %v413 = vadd.f32 0.0, %v412
  %v414 = vpop.f32.mrf.mxu0
  %v415 = vadd.f32 0.0, %v414
  %v416 = vpop.f32.mrf.mxu0
  %v417 = vadd.f32 0.0, %v416
  %v418 = vpop.f32.mrf.mxu0
  %v419 = vadd.f32 0.0, %v418
  %420 = vmatprep.mubr.bf16.mxu0 0
  %421 = vmatmul.mubr.bf16.gmra.mxu0 %v237
  %v422 = vpop.f32.mrf.mxu0
  %v423 = vadd.f32 0.0, %v422
  %v424 = vpop.f32.mrf.mxu0
  %v425 = vadd.f32 0.0, %v424
  %v426 = vpop.f32.mrf.mxu0
  %v427 = vadd.f32 0.0, %v426
  %v428 = vpop.f32.mrf.mxu0
  %v429 = vadd.f32 0.0, %v428
  %430 = vmatprep.mubr.bf16.mxu0 0
  %431 = vmatmul.mubr.bf16.gmra.mxu0 %v240
  %v432 = vpop.f32.mrf.mxu0
  %v433 = vadd.f32 0.0, %v432
  %v434 = vpop.f32.mrf.mxu0
  %v435 = vadd.f32 0.0, %v434
  %v436 = vpop.f32.mrf.mxu0
  %v437 = vadd.f32 0.0, %v436
  %v438 = vpop.f32.mrf.mxu0
  %v439 = vadd.f32 0.0, %v438
  %440 = vmatprep.mubr.bf16.mxu0 0
  %441 = vmatmul.mubr.bf16.gmra.mxu0 %v243
  %v442 = vpop.f32.mrf.mxu0
  %v443 = vadd.f32 0.0, %v442
  %v444 = vpop.f32.mrf.mxu0
  %v445 = vadd.f32 0.0, %v444
  %v446 = vpop.f32.mrf.mxu0
  %v447 = vadd.f32 0.0, %v446
  %v448 = vpop.f32.mrf.mxu0
  %v449 = vadd.f32 0.0, %v448
  %450 = vdwg.mxu0
  %451 = vmatprep.subr.bf16.mxu0 0
  %452 = vmatpush1.bf16.msra.mxu0 0
  %453 = vmatprep.subr.bf16.mxu0 0
  %454 = vmatpush1.bf16.msra.mxu0 0
  %455 = vmatprep.subr.bf16.mxu0 0
  %456 = vmatpush1.bf16.msra.mxu0 0
  %457 = vmatprep.subr.bf16.mxu0 0
  %458 = vmatpush1.bf16.msra.mxu0 0
  %459 = vmatprep.subr.bf16.mxu0 0
  %460 = vmatpush1.bf16.msra.mxu0 0
  %461 = vmatprep.subr.bf16.mxu0 %v256
  %462 = vmatpush1.bf16.msra.mxu0 %v253
  %463 = vmatprep.subr.bf16.mxu0 %v183
  %464 = vmatpush1.bf16.msra.mxu0 %v182
  %465 = vmatprep.subr.bf16.mxu0 %v179
  %466 = vmatpush1.bf16.msra.mxu0 %v178
  %467 = vmatprep.subr.bf16.mxu0 0
  %468 = vmatpush2.bf16.msra.mxu0 0
  %469 = vmatprep.subr.bf16.mxu0 0
  %470 = vmatpush2.bf16.msra.mxu0 0
  %471 = vmatprep.subr.bf16.mxu0 0
  %472 = vmatpush2.bf16.msra.mxu0 0
  %473 = vmatprep.subr.bf16.mxu0 0
  %474 = vmatpush2.bf16.msra.mxu0 0
  %475 = vmatprep.subr.bf16.mxu0 0
  %476 = vmatpush2.bf16.msra.mxu0 0
  %477 = vmatprep.subr.bf16.mxu0 0
  %478 = vmatpush2.bf16.msra.mxu0 0
  %479 = vmatprep.subr.bf16.mxu0 0
  %480 = vmatpush2.bf16.msra.mxu0 0
  %481 = vmatprep.subr.bf16.mxu0 0
  %482 = vmatpush2.bf16.msra.mxu0 0
  %483 = vmatprep.mubr.bf16.mxu0 0
  %484 = vmatmul.mubr.bf16.gmra.mxu0 %v198
  %v485 = vpop.f32.mrf.mxu0
  %v486 = vadd.f32 0.0, %v485
  %v487 = vpop.f32.mrf.mxu0
  %v488 = vadd.f32 0.0, %v487
  %v489 = vpop.f32.mrf.mxu0
  %v490 = vadd.f32 0.0, %v489
  %v491 = vpop.f32.mrf.mxu0
  %v492 = vadd.f32 0.0, %v491
  %493 = vmatprep.mubr.bf16.mxu0 0
  %494 = vmatmul.mubr.bf16.gmra.mxu0 %v201
  %v495 = vpop.f32.mrf.mxu0
  %v496 = vadd.f32 0.0, %v495
  %v497 = vpop.f32.mrf.mxu0
  %v498 = vadd.f32 0.0, %v497
  %v499 = vpop.f32.mrf.mxu0
  %v500 = vadd.f32 0.0, %v499
  %v501 = vpop.f32.mrf.mxu0
  %v502 = vadd.f32 0.0, %v501
  %503 = vmatprep.mubr.bf16.mxu0 0
  %504 = vmatmul.mubr.bf16.gmra.mxu0 %v204
  %v505 = vpop.f32.mrf.mxu0
  %v506 = vadd.f32 0.0, %v505
  %v507 = vpop.f32.mrf.mxu0
  %v508 = vadd.f32 0.0, %v507
  %v509 = vpop.f32.mrf.mxu0
  %v510 = vadd.f32 0.0, %v509
  %v511 = vpop.f32.mrf.mxu0
  %v512 = vadd.f32 0.0, %v511
  %513 = vmatprep.mubr.bf16.mxu0 0
  %514 = vmatmul.mubr.bf16.gmra.mxu0 %v207
  %v515 = vpop.f32.mrf.mxu0
  %v516 = vadd.f32 0.0, %v515
  %v517 = vpop.f32.mrf.mxu0
  %v518 = vadd.f32 0.0, %v517
  %v519 = vpop.f32.mrf.mxu0
  %v520 = vadd.f32 0.0, %v519
  %v521 = vpop.f32.mrf.mxu0
  %v522 = vadd.f32 0.0, %v521
  %523 = vmatprep.mubr.bf16.mxu0 0
  %524 = vmatmul.mubr.bf16.gmra.mxu0 %v210
  %v525 = vpop.f32.mrf.mxu0
  %v526 = vadd.f32 0.0, %v525
  %v527 = vpop.f32.mrf.mxu0
  %v528 = vadd.f32 0.0, %v527
  %v529 = vpop.f32.mrf.mxu0
  %v530 = vadd.f32 0.0, %v529
  %v531 = vpop.f32.mrf.mxu0
  %v532 = vadd.f32 0.0, %v531
  %533 = vmatprep.mubr.bf16.mxu0 0
  %534 = vmatmul.mubr.bf16.gmra.mxu0 %v213
  %v535 = vpop.f32.mrf.mxu0
  %v536 = vadd.f32 0.0, %v535
  %v537 = vpop.f32.mrf.mxu0
  %v538 = vadd.f32 0.0, %v537
  %v539 = vpop.f32.mrf.mxu0
  %v540 = vadd.f32 0.0, %v539
  %v541 = vpop.f32.mrf.mxu0
  %v542 = vadd.f32 0.0, %v541
  %543 = vmatprep.mubr.bf16.mxu0 0
  %544 = vmatmul.mubr.bf16.gmra.mxu0 %v216
  %v545 = vpop.f32.mrf.mxu0
  %v546 = vadd.f32 0.0, %v545
  %v547 = vpop.f32.mrf.mxu0
  %v548 = vadd.f32 0.0, %v547
  %v549 = vpop.f32.mrf.mxu0
  %v550 = vadd.f32 0.0, %v549
  %v551 = vpop.f32.mrf.mxu0
  %v552 = vadd.f32 0.0, %v551
  %553 = vmatprep.mubr.bf16.mxu0 0
  %554 = vmatmul.mubr.bf16.gmra.mxu0 %v219
  %v555 = vpop.f32.mrf.mxu0
  %v556 = vadd.f32 0.0, %v555
  %v557 = vpop.f32.mrf.mxu0
  %v558 = vadd.f32 0.0, %v557
  %v559 = vpop.f32.mrf.mxu0
  %v560 = vadd.f32 0.0, %v559
  %v561 = vpop.f32.mrf.mxu0
  %v562 = vadd.f32 0.0, %v561
  %563 = vmatprep.mubr.bf16.mxu0 0
  %564 = vmatmul.mubr.bf16.gmra.mxu0 %v222
  %v565 = vpop.f32.mrf.mxu0
  %v566 = vadd.f32 0.0, %v565
  %v567 = vpop.f32.mrf.mxu0
  %v568 = vadd.f32 0.0, %v567
  %v569 = vpop.f32.mrf.mxu0
  %v570 = vadd.f32 0.0, %v569
  %v571 = vpop.f32.mrf.mxu0
  %v572 = vadd.f32 0.0, %v571
  %573 = vmatprep.mubr.bf16.mxu0 0
  %574 = vmatmul.mubr.bf16.gmra.mxu0 %v225
  %v575 = vpop.f32.mrf.mxu0
  %v576 = vadd.f32 0.0, %v575
  %v577 = vpop.f32.mrf.mxu0
  %v578 = vadd.f32 0.0, %v577
  %v579 = vpop.f32.mrf.mxu0
  %v580 = vadd.f32 0.0, %v579
  %v581 = vpop.f32.mrf.mxu0
  %v582 = vadd.f32 0.0, %v581
  %583 = vmatprep.mubr.bf16.mxu0 0
  %584 = vmatmul.mubr.bf16.gmra.mxu0 %v228
  %v585 = vpop.f32.mrf.mxu0
  %v586 = vadd.f32 0.0, %v585
  %v587 = vpop.f32.mrf.mxu0
  %v588 = vadd.f32 0.0, %v587
  %v589 = vpop.f32.mrf.mxu0
  %v590 = vadd.f32 0.0, %v589
  %v591 = vpop.f32.mrf.mxu0
  %v592 = vadd.f32 0.0, %v591
  %593 = vmatprep.mubr.bf16.mxu0 0
  %594 = vmatmul.mubr.bf16.gmra.mxu0 %v231
  %v595 = vpop.f32.mrf.mxu0
  %v596 = vadd.f32 0.0, %v595
  %v597 = vpop.f32.mrf.mxu0
  %v598 = vadd.f32 0.0, %v597
  %v599 = vpop.f32.mrf.mxu0
  %v600 = vadd.f32 0.0, %v599
  %v601 = vpop.f32.mrf.mxu0
  %v602 = vadd.f32 0.0, %v601
  %603 = vmatprep.mubr.bf16.mxu0 0
  %604 = vmatmul.mubr.bf16.gmra.mxu0 %v234
  %v605 = vpop.f32.mrf.mxu0
  %v606 = vadd.f32 0.0, %v605
  %v607 = vpop.f32.mrf.mxu0
  %v608 = vadd.f32 0.0, %v607
  %v609 = vpop.f32.mrf.mxu0
  %v610 = vadd.f32 0.0, %v609
  %v611 = vpop.f32.mrf.mxu0
  %v612 = vadd.f32 0.0, %v611
  %613 = vmatprep.mubr.bf16.mxu0 0
  %614 = vmatmul.mubr.bf16.gmra.mxu0 %v237
  %v615 = vpop.f32.mrf.mxu0
  %v616 = vadd.f32 0.0, %v615
  %v617 = vpop.f32.mrf.mxu0
  %v618 = vadd.f32 0.0, %v617
  %v619 = vpop.f32.mrf.mxu0
  %v620 = vadd.f32 0.0, %v619
  %v621 = vpop.f32.mrf.mxu0
  %v622 = vadd.f32 0.0, %v621
  %623 = vmatprep.mubr.bf16.mxu0 0
  %624 = vmatmul.mubr.bf16.gmra.mxu0 %v240
  %v625 = vpop.f32.mrf.mxu0
  %v626 = vadd.f32 0.0, %v625
  %v627 = vpop.f32.mrf.mxu0
  %v628 = vadd.f32 0.0, %v627
  %v629 = vpop.f32.mrf.mxu0
  %v630 = vadd.f32 0.0, %v629
  %v631 = vpop.f32.mrf.mxu0
  %v632 = vadd.f32 0.0, %v631
  %633 = vmatprep.mubr.bf16.mxu0 0
  %634 = vmatmul.mubr.bf16.gmra.mxu0 %v243
  %v635 = vpop.f32.mrf.mxu0
  %v636 = vadd.f32 0.0, %v635
  %v637 = vpop.f32.mrf.mxu0
  %v638 = vadd.f32 0.0, %v637
  %v639 = vpop.f32.mrf.mxu0
  %v640 = vadd.f32 0.0, %v639
  %v641 = vpop.f32.mrf.mxu0
  %v642 = vadd.f32 0.0, %v641
  %643 = vdwg.mxu0
  %v644 = vadd.f32 %v293, %v295
  %v645 = vadd.f32 %v644, %v486
  %v646 = vadd.f32 %v645, %v488
  %647 = vadd.xlane.f32.xlu0 %v646
  %v648 = vpop.xlane.xlu0 %647
  %v649 = vadd.f32 %v297, %v299
  %v650 = vadd.f32 %v649, %v490
  %v651 = vadd.f32 %v650, %v492
  %652 = vadd.xlane.f32.xlu0 %v651
  %v653 = vpop.xlane.xlu0 %652
  %v654 = vadd.f32 %v303, %v305
  %v655 = vadd.f32 %v654, %v496
  %v656 = vadd.f32 %v655, %v498
  %657 = vadd.xlane.f32.xlu0 %v656
  %v658 = vpop.xlane.xlu0 %657
  %v659 = vadd.f32 %v307, %v309
  %v660 = vadd.f32 %v659, %v500
  %v661 = vadd.f32 %v660, %v502
  %662 = vadd.xlane.f32.xlu0 %v661
  %v663 = vpop.xlane.xlu0 %662
  %v664 = vadd.f32 %v313, %v315
  %v665 = vadd.f32 %v664, %v506
  %v666 = vadd.f32 %v665, %v508
  %667 = vadd.xlane.f32.xlu0 %v666
  %v668 = vpop.xlane.xlu0 %667
  %v669 = vadd.f32 %v317, %v319
  %v670 = vadd.f32 %v669, %v510
  %v671 = vadd.f32 %v670, %v512
  %672 = vadd.xlane.f32.xlu0 %v671
  %v673 = vpop.xlane.xlu0 %672
  %v674 = vadd.f32 %v323, %v325
  %v675 = vadd.f32 %v674, %v516
  %v676 = vadd.f32 %v675, %v518
  %677 = vadd.xlane.f32.xlu0 %v676
  %v678 = vpop.xlane.xlu0 %677
  %v679 = vadd.f32 %v327, %v329
  %v680 = vadd.f32 %v679, %v520
  %v681 = vadd.f32 %v680, %v522
  %682 = vadd.xlane.f32.xlu0 %v681
  %v683 = vpop.xlane.xlu0 %682
  %v684 = vadd.f32 %v333, %v335
  %v685 = vadd.f32 %v684, %v526
  %v686 = vadd.f32 %v685, %v528
  %687 = vadd.xlane.f32.xlu0 %v686
  %v688 = vpop.xlane.xlu0 %687
  %v689 = vadd.f32 %v337, %v339
  %v690 = vadd.f32 %v689, %v530
  %v691 = vadd.f32 %v690, %v532
  %692 = vadd.xlane.f32.xlu0 %v691
  %v693 = vpop.xlane.xlu0 %692
  %v694 = vadd.f32 %v343, %v345
  %v695 = vadd.f32 %v694, %v536
  %v696 = vadd.f32 %v695, %v538
  %697 = vadd.xlane.f32.xlu0 %v696
  %v698 = vpop.xlane.xlu0 %697
  %v699 = vadd.f32 %v347, %v349
  %v700 = vadd.f32 %v699, %v540
  %v701 = vadd.f32 %v700, %v542
  %702 = vadd.xlane.f32.xlu0 %v701
  %v703 = vpop.xlane.xlu0 %702
  %v704 = vadd.f32 %v353, %v355
  %v705 = vadd.f32 %v704, %v546
  %v706 = vadd.f32 %v705, %v548
  %707 = vadd.xlane.f32.xlu0 %v706
  %v708 = vpop.xlane.xlu0 %707
  %v709 = vadd.f32 %v357, %v359
  %v710 = vadd.f32 %v709, %v550
  %v711 = vadd.f32 %v710, %v552
  %712 = vadd.xlane.f32.xlu0 %v711
  %v713 = vpop.xlane.xlu0 %712
  %v714 = vadd.f32 %v363, %v365
  %v715 = vadd.f32 %v714, %v556
  %v716 = vadd.f32 %v715, %v558
  %717 = vadd.xlane.f32.xlu0 %v716
  %v718 = vpop.xlane.xlu0 %717
  %v719 = vadd.f32 %v367, %v369
  %v720 = vadd.f32 %v719, %v560
  %v721 = vadd.f32 %v720, %v562
  %722 = vadd.xlane.f32.xlu0 %v721
  %v723 = vpop.xlane.xlu0 %722
  %v724 = vadd.f32 %v373, %v375
  %v725 = vadd.f32 %v724, %v566
  %v726 = vadd.f32 %v725, %v568
  %727 = vadd.xlane.f32.xlu0 %v726
  %v728 = vpop.xlane.xlu0 %727
  %v729 = vadd.f32 %v377, %v379
  %v730 = vadd.f32 %v729, %v570
  %v731 = vadd.f32 %v730, %v572
  %732 = vadd.xlane.f32.xlu0 %v731
  %v733 = vpop.xlane.xlu0 %732
  %v734 = vadd.f32 %v383, %v385
  %v735 = vadd.f32 %v734, %v576
  %v736 = vadd.f32 %v735, %v578
  %737 = vadd.xlane.f32.xlu0 %v736
  %v738 = vpop.xlane.xlu0 %737
  %v739 = vadd.f32 %v387, %v389
  %v740 = vadd.f32 %v739, %v580
  %v741 = vadd.f32 %v740, %v582
  %742 = vadd.xlane.f32.xlu0 %v741
  %v743 = vpop.xlane.xlu0 %742
  %v744 = vadd.f32 %v393, %v395
  %v745 = vadd.f32 %v744, %v586
  %v746 = vadd.f32 %v745, %v588
  %747 = vadd.xlane.f32.xlu0 %v746
  %v748 = vpop.xlane.xlu0 %747
  %v749 = vadd.f32 %v397, %v399
  %v750 = vadd.f32 %v749, %v590
  %v751 = vadd.f32 %v750, %v592
  %752 = vadd.xlane.f32.xlu0 %v751
  %v753 = vpop.xlane.xlu0 %752
  %v754 = vadd.f32 %v403, %v405
  %v755 = vadd.f32 %v754, %v596
  %v756 = vadd.f32 %v755, %v598
  %757 = vadd.xlane.f32.xlu0 %v756
  %v758 = vpop.xlane.xlu0 %757
  %v759 = vadd.f32 %v407, %v409
  %v760 = vadd.f32 %v759, %v600
  %v761 = vadd.f32 %v760, %v602
  %762 = vadd.xlane.f32.xlu0 %v761
  %v763 = vpop.xlane.xlu0 %762
  %v764 = vadd.f32 %v413, %v415
  %v765 = vadd.f32 %v764, %v606
  %v766 = vadd.f32 %v765, %v608
  %767 = vadd.xlane.f32.xlu0 %v766
  %v768 = vpop.xlane.xlu0 %767
  %v769 = vadd.f32 %v417, %v419
  %v770 = vadd.f32 %v769, %v610
  %v771 = vadd.f32 %v770, %v612
  %772 = vadd.xlane.f32.xlu0 %v771
  %v773 = vpop.xlane.xlu0 %772
  %v774 = vadd.f32 %v423, %v425
  %v775 = vadd.f32 %v774, %v616
  %v776 = vadd.f32 %v775, %v618
  %777 = vadd.xlane.f32.xlu0 %v776
  %v778 = vpop.xlane.xlu0 %777
  %v779 = vadd.f32 %v427, %v429
  %v780 = vadd.f32 %v779, %v620
  %v781 = vadd.f32 %v780, %v622
  %782 = vadd.xlane.f32.xlu0 %v781
  %v783 = vpop.xlane.xlu0 %782
  %v784 = vadd.f32 %v433, %v435
  %v785 = vadd.f32 %v784, %v626
  %v786 = vadd.f32 %v785, %v628
  %787 = vadd.xlane.f32.xlu0 %v786
  %v788 = vpop.xlane.xlu0 %787
  %v789 = vadd.f32 %v437, %v439
  %v790 = vadd.f32 %v789, %v630
  %v791 = vadd.f32 %v790, %v632
  %792 = vadd.xlane.f32.xlu0 %v791
  %v793 = vpop.xlane.xlu0 %792
  %v794 = vadd.f32 %v443, %v445
  %v795 = vadd.f32 %v794, %v636
  %v796 = vadd.f32 %v795, %v638
  %797 = vadd.xlane.f32.xlu0 %v796
  %v798 = vpop.xlane.xlu0 %797
  %v799 = vadd.f32 %v447, %v449
  %v800 = vadd.f32 %v799, %v640
  %v801 = vadd.f32 %v800, %v642
  %802 = vadd.xlane.f32.xlu0 %v801
  %v803 = vpop.xlane.xlu0 %802
  %v804 = vmul.f32 %v293, %v293
  %v805 = vmul.f32 %v295, %v295
  %v806 = vmul.f32 %v486, %v486
  %v807 = vmul.f32 %v488, %v488
  %v808 = vmul.f32 %v297, %v297
  %v809 = vmul.f32 %v299, %v299
  %v810 = vmul.f32 %v490, %v490
  %v811 = vmul.f32 %v492, %v492
  %v812 = vmul.f32 %v303, %v303
  %v813 = vmul.f32 %v305, %v305
  %v814 = vmul.f32 %v496, %v496
  %v815 = vmul.f32 %v498, %v498
  %v816 = vmul.f32 %v307, %v307
  %v817 = vmul.f32 %v309, %v309
  %v818 = vmul.f32 %v500, %v500
  %v819 = vmul.f32 %v502, %v502
  %v820 = vmul.f32 %v313, %v313
  %v821 = vmul.f32 %v315, %v315
  %v822 = vmul.f32 %v506, %v506
  %v823 = vmul.f32 %v508, %v508
  %v824 = vmul.f32 %v317, %v317
  %v825 = vmul.f32 %v319, %v319
  %v826 = vmul.f32 %v510, %v510
  %v827 = vmul.f32 %v512, %v512
  %v828 = vmul.f32 %v323, %v323
  %v829 = vmul.f32 %v325, %v325
  %v830 = vmul.f32 %v516, %v516
  %v831 = vmul.f32 %v518, %v518
  %v832 = vmul.f32 %v327, %v327
  %v833 = vmul.f32 %v329, %v329
  %v834 = vmul.f32 %v520, %v520
  %v835 = vmul.f32 %v522, %v522
  %v836 = vmul.f32 %v333, %v333
  %v837 = vmul.f32 %v335, %v335
  %v838 = vmul.f32 %v526, %v526
  %v839 = vmul.f32 %v528, %v528
  %v840 = vmul.f32 %v337, %v337
  %v841 = vmul.f32 %v339, %v339
  %v842 = vmul.f32 %v530, %v530
  %v843 = vmul.f32 %v532, %v532
  %v844 = vmul.f32 %v343, %v343
  %v845 = vmul.f32 %v345, %v345
  %v846 = vmul.f32 %v536, %v536
  %v847 = vmul.f32 %v538, %v538
  %v848 = vmul.f32 %v347, %v347
  %v849 = vmul.f32 %v349, %v349
  %v850 = vmul.f32 %v540, %v540
  %v851 = vmul.f32 %v542, %v542
  %v852 = vmul.f32 %v353, %v353
  %v853 = vmul.f32 %v355, %v355
  %v854 = vmul.f32 %v546, %v546
  %v855 = vmul.f32 %v548, %v548
  %v856 = vmul.f32 %v357, %v357
  %v857 = vmul.f32 %v359, %v359
  %v858 = vmul.f32 %v550, %v550
  %v859 = vmul.f32 %v552, %v552
  %v860 = vmul.f32 %v363, %v363
  %v861 = vmul.f32 %v365, %v365
  %v862 = vmul.f32 %v556, %v556
  %v863 = vmul.f32 %v558, %v558
  %v864 = vmul.f32 %v367, %v367
  %v865 = vmul.f32 %v369, %v369
  %v866 = vmul.f32 %v560, %v560
  %v867 = vmul.f32 %v562, %v562
  %v868 = vmul.f32 %v373, %v373
  %v869 = vmul.f32 %v375, %v375
  %v870 = vmul.f32 %v566, %v566
  %v871 = vmul.f32 %v568, %v568
  %v872 = vmul.f32 %v377, %v377
  %v873 = vmul.f32 %v379, %v379
  %v874 = vmul.f32 %v570, %v570
  %v875 = vmul.f32 %v572, %v572
  %v876 = vmul.f32 %v383, %v383
  %v877 = vmul.f32 %v385, %v385
  %v878 = vmul.f32 %v576, %v576
  %v879 = vmul.f32 %v578, %v578
  %v880 = vmul.f32 %v387, %v387
  %v881 = vmul.f32 %v389, %v389
  %v882 = vmul.f32 %v580, %v580
  %v883 = vmul.f32 %v582, %v582
  %v884 = vmul.f32 %v393, %v393
  %v885 = vmul.f32 %v395, %v395
  %v886 = vmul.f32 %v586, %v586
  %v887 = vmul.f32 %v588, %v588
  %v888 = vmul.f32 %v397, %v397
  %v889 = vmul.f32 %v399, %v399
  %v890 = vmul.f32 %v590, %v590
  %v891 = vmul.f32 %v592, %v592
  %v892 = vmul.f32 %v403, %v403
  %v893 = vmul.f32 %v405, %v405
  %v894 = vmul.f32 %v596, %v596
  %v895 = vmul.f32 %v598, %v598
  %v896 = vmul.f32 %v407, %v407
  %v897 = vmul.f32 %v409, %v409
  %v898 = vmul.f32 %v600, %v600
  %v899 = vmul.f32 %v602, %v602
  %v900 = vmul.f32 %v413, %v413
  %v901 = vmul.f32 %v415, %v415
  %v902 = vmul.f32 %v606, %v606
  %v903 = vmul.f32 %v608, %v608
  %v904 = vmul.f32 %v417, %v417
  %v905 = vmul.f32 %v419, %v419
  %v906 = vmul.f32 %v610, %v610
  %v907 = vmul.f32 %v612, %v612
  %v908 = vmul.f32 %v423, %v423
  %v909 = vmul.f32 %v425, %v425
  %v910 = vmul.f32 %v616, %v616
  %v911 = vmul.f32 %v618, %v618
  %v912 = vmul.f32 %v427, %v427
  %v913 = vmul.f32 %v429, %v429
  %v914 = vmul.f32 %v620, %v620
  %v915 = vmul.f32 %v622, %v622
  %v916 = vmul.f32 %v433, %v433
  %v917 = vmul.f32 %v435, %v435
  %v918 = vmul.f32 %v626, %v626
  %v919 = vmul.f32 %v628, %v628
  %v920 = vmul.f32 %v437, %v437
  %v921 = vmul.f32 %v439, %v439
  %v922 = vmul.f32 %v630, %v630
  %v923 = vmul.f32 %v632, %v632
  %v924 = vmul.f32 %v443, %v443
  %v925 = vmul.f32 %v445, %v445
  %v926 = vmul.f32 %v636, %v636
  %v927 = vmul.f32 %v638, %v638
  %v928 = vmul.f32 %v447, %v447
  %v929 = vmul.f32 %v449, %v449
  %v930 = vmul.f32 %v640, %v640
  %v931 = vmul.f32 %v642, %v642
  %v932 = vadd.f32 %v804, %v805
  %v933 = vadd.f32 %v932, %v806
  %v934 = vadd.f32 %v933, %v807
  %935 = vadd.xlane.f32.xlu0 %v934
  %v936 = vpop.xlane.xlu0 %935
  %v937 = vadd.f32 %v808, %v809
  %v938 = vadd.f32 %v937, %v810
  %v939 = vadd.f32 %v938, %v811
  %940 = vadd.xlane.f32.xlu0 %v939
  %v941 = vpop.xlane.xlu0 %940
  %v942 = vadd.f32 %v812, %v813
  %v943 = vadd.f32 %v942, %v814
  %v944 = vadd.f32 %v943, %v815
  %945 = vadd.xlane.f32.xlu0 %v944
  %v946 = vpop.xlane.xlu0 %945
  %v947 = vadd.f32 %v816, %v817
  %v948 = vadd.f32 %v947, %v818
  %v949 = vadd.f32 %v948, %v819
  %950 = vadd.xlane.f32.xlu0 %v949
  %v951 = vpop.xlane.xlu0 %950
  %v952 = vadd.f32 %v820, %v821
  %v953 = vadd.f32 %v952, %v822
  %v954 = vadd.f32 %v953, %v823
  %955 = vadd.xlane.f32.xlu0 %v954
  %v956 = vpop.xlane.xlu0 %955
  %v957 = vadd.f32 %v824, %v825
  %v958 = vadd.f32 %v957, %v826
  %v959 = vadd.f32 %v958, %v827
  %960 = vadd.xlane.f32.xlu0 %v959
  %v961 = vpop.xlane.xlu0 %960
  %v962 = vadd.f32 %v828, %v829
  %v963 = vadd.f32 %v962, %v830
  %v964 = vadd.f32 %v963, %v831
  %965 = vadd.xlane.f32.xlu0 %v964
  %v966 = vpop.xlane.xlu0 %965
  %v967 = vadd.f32 %v832, %v833
  %v968 = vadd.f32 %v967, %v834
  %v969 = vadd.f32 %v968, %v835
  %970 = vadd.xlane.f32.xlu0 %v969
  %v971 = vpop.xlane.xlu0 %970
  %v972 = vadd.f32 %v836, %v837
  %v973 = vadd.f32 %v972, %v838
  %v974 = vadd.f32 %v973, %v839
  %975 = vadd.xlane.f32.xlu0 %v974
  %v976 = vpop.xlane.xlu0 %975
  %v977 = vadd.f32 %v840, %v841
  %v978 = vadd.f32 %v977, %v842
  %v979 = vadd.f32 %v978, %v843
  %980 = vadd.xlane.f32.xlu0 %v979
  %v981 = vpop.xlane.xlu0 %980
  %v982 = vadd.f32 %v844, %v845
  %v983 = vadd.f32 %v982, %v846
  %v984 = vadd.f32 %v983, %v847
  %985 = vadd.xlane.f32.xlu0 %v984
  %v986 = vpop.xlane.xlu0 %985
  %v987 = vadd.f32 %v848, %v849
  %v988 = vadd.f32 %v987, %v850
  %v989 = vadd.f32 %v988, %v851
  %990 = vadd.xlane.f32.xlu0 %v989
  %v991 = vpop.xlane.xlu0 %990
  %v992 = vadd.f32 %v852, %v853
  %v993 = vadd.f32 %v992, %v854
  %v994 = vadd.f32 %v993, %v855
  %995 = vadd.xlane.f32.xlu0 %v994
  %v996 = vpop.xlane.xlu0 %995
  %v997 = vadd.f32 %v856, %v857
  %v998 = vadd.f32 %v997, %v858
  %v999 = vadd.f32 %v998, %v859
  %1000 = vadd.xlane.f32.xlu0 %v999
  %v1001 = vpop.xlane.xlu0 %1000
  %v1002 = vadd.f32 %v860, %v861
  %v1003 = vadd.f32 %v1002, %v862
  %v1004 = vadd.f32 %v1003, %v863
  %1005 = vadd.xlane.f32.xlu0 %v1004
  %v1006 = vpop.xlane.xlu0 %1005
  %v1007 = vadd.f32 %v864, %v865
  %v1008 = vadd.f32 %v1007, %v866
  %v1009 = vadd.f32 %v1008, %v867
  %1010 = vadd.xlane.f32.xlu0 %v1009
  %v1011 = vpop.xlane.xlu0 %1010
  %v1012 = vadd.f32 %v868, %v869
  %v1013 = vadd.f32 %v1012, %v870
  %v1014 = vadd.f32 %v1013, %v871
  %1015 = vadd.xlane.f32.xlu0 %v1014
  %v1016 = vpop.xlane.xlu0 %1015
  %v1017 = vadd.f32 %v872, %v873
  %v1018 = vadd.f32 %v1017, %v874
  %v1019 = vadd.f32 %v1018, %v875
  %1020 = vadd.xlane.f32.xlu0 %v1019
  %v1021 = vpop.xlane.xlu0 %1020
  %v1022 = vadd.f32 %v876, %v877
  %v1023 = vadd.f32 %v1022, %v878
  %v1024 = vadd.f32 %v1023, %v879
  %1025 = vadd.xlane.f32.xlu0 %v1024
  %v1026 = vpop.xlane.xlu0 %1025
  %v1027 = vadd.f32 %v880, %v881
  %v1028 = vadd.f32 %v1027, %v882
  %v1029 = vadd.f32 %v1028, %v883
  %1030 = vadd.xlane.f32.xlu0 %v1029
  %v1031 = vpop.xlane.xlu0 %1030
  %v1032 = vadd.f32 %v884, %v885
  %v1033 = vadd.f32 %v1032, %v886
  %v1034 = vadd.f32 %v1033, %v887
  %1035 = vadd.xlane.f32.xlu0 %v1034
  %v1036 = vpop.xlane.xlu0 %1035
  %v1037 = vadd.f32 %v888, %v889
  %v1038 = vadd.f32 %v1037, %v890
  %v1039 = vadd.f32 %v1038, %v891
  %1040 = vadd.xlane.f32.xlu0 %v1039
  %v1041 = vpop.xlane.xlu0 %1040
  %v1042 = vadd.f32 %v892, %v893
  %v1043 = vadd.f32 %v1042, %v894
  %v1044 = vadd.f32 %v1043, %v895
  %1045 = vadd.xlane.f32.xlu0 %v1044
  %v1046 = vpop.xlane.xlu0 %1045
  %v1047 = vadd.f32 %v896, %v897
  %v1048 = vadd.f32 %v1047, %v898
  %v1049 = vadd.f32 %v1048, %v899
  %1050 = vadd.xlane.f32.xlu0 %v1049
  %v1051 = vpop.xlane.xlu0 %1050
  %v1052 = vadd.f32 %v900, %v901
  %v1053 = vadd.f32 %v1052, %v902
  %v1054 = vadd.f32 %v1053, %v903
  %1055 = vadd.xlane.f32.xlu0 %v1054
  %v1056 = vpop.xlane.xlu0 %1055
  %v1057 = vadd.f32 %v904, %v905
  %v1058 = vadd.f32 %v1057, %v906
  %v1059 = vadd.f32 %v1058, %v907
  %1060 = vadd.xlane.f32.xlu0 %v1059
  %v1061 = vpop.xlane.xlu0 %1060
  %v1062 = vadd.f32 %v908, %v909
  %v1063 = vadd.f32 %v1062, %v910
  %v1064 = vadd.f32 %v1063, %v911
  %1065 = vadd.xlane.f32.xlu0 %v1064
  %v1066 = vpop.xlane.xlu0 %1065
  %v1067 = vadd.f32 %v912, %v913
  %v1068 = vadd.f32 %v1067, %v914
  %v1069 = vadd.f32 %v1068, %v915
  %1070 = vadd.xlane.f32.xlu0 %v1069
  %v1071 = vpop.xlane.xlu0 %1070
  %v1072 = vadd.f32 %v916, %v917
  %v1073 = vadd.f32 %v1072, %v918
  %v1074 = vadd.f32 %v1073, %v919
  %1075 = vadd.xlane.f32.xlu0 %v1074
  %v1076 = vpop.xlane.xlu0 %1075
  %v1077 = vadd.f32 %v920, %v921
  %v1078 = vadd.f32 %v1077, %v922
  %v1079 = vadd.f32 %v1078, %v923
  %1080 = vadd.xlane.f32.xlu0 %v1079
  %v1081 = vpop.xlane.xlu0 %1080
  %v1082 = vadd.f32 %v924, %v925
  %v1083 = vadd.f32 %v1082, %v926
  %v1084 = vadd.f32 %v1083, %v927
  %1085 = vadd.xlane.f32.xlu0 %v1084
  %v1086 = vpop.xlane.xlu0 %1085
  %v1087 = vadd.f32 %v928, %v929
  %v1088 = vadd.f32 %v1087, %v930
  %v1089 = vadd.f32 %v1088, %v931
  %1090 = vadd.xlane.f32.xlu0 %v1089
  %v1091 = vpop.xlane.xlu0 %1090
  %v1092 = vmul.f32 %v648, 0.001953125
  %v1093 = vmul.f32 %v653, 0.001953125
  %v1094 = vmul.f32 %v658, 0.001953125
  %v1095 = vmul.f32 %v663, 0.001953125
  %v1096 = vmul.f32 %v668, 0.001953125
  %v1097 = vmul.f32 %v673, 0.001953125
  %v1098 = vmul.f32 %v678, 0.001953125
  %v1099 = vmul.f32 %v683, 0.001953125
  %v1100 = vmul.f32 %v688, 0.001953125
  %v1101 = vmul.f32 %v693, 0.001953125
  %v1102 = vmul.f32 %v698, 0.001953125
  %v1103 = vmul.f32 %v703, 0.001953125
  %v1104 = vmul.f32 %v708, 0.001953125
  %v1105 = vmul.f32 %v713, 0.001953125
  %v1106 = vmul.f32 %v718, 0.001953125
  %v1107 = vmul.f32 %v723, 0.001953125
  %v1108 = vmul.f32 %v728, 0.001953125
  %v1109 = vmul.f32 %v733, 0.001953125
  %v1110 = vmul.f32 %v738, 0.001953125
  %v1111 = vmul.f32 %v743, 0.001953125
  %v1112 = vmul.f32 %v748, 0.001953125
  %v1113 = vmul.f32 %v753, 0.001953125
  %v1114 = vmul.f32 %v758, 0.001953125
  %v1115 = vmul.f32 %v763, 0.001953125
  %v1116 = vmul.f32 %v768, 0.001953125
  %v1117 = vmul.f32 %v773, 0.001953125
  %v1118 = vmul.f32 %v778, 0.001953125
  %v1119 = vmul.f32 %v783, 0.001953125
  %v1120 = vmul.f32 %v788, 0.001953125
  %v1121 = vmul.f32 %v793, 0.001953125
  %v1122 = vmul.f32 %v798, 0.001953125
  %v1123 = vmul.f32 %v803, 0.001953125
  %v1124 = vmul.f32 %v936, 0.001953125
  %v1125 = vmul.f32 %v941, 0.001953125
  %v1126 = vmul.f32 %v946, 0.001953125
  %v1127 = vmul.f32 %v951, 0.001953125
  %v1128 = vmul.f32 %v956, 0.001953125
  %v1129 = vmul.f32 %v961, 0.001953125
  %v1130 = vmul.f32 %v966, 0.001953125
  %v1131 = vmul.f32 %v971, 0.001953125
  %v1132 = vmul.f32 %v976, 0.001953125
  %v1133 = vmul.f32 %v981, 0.001953125
  %v1134 = vmul.f32 %v986, 0.001953125
  %v1135 = vmul.f32 %v991, 0.001953125
  %v1136 = vmul.f32 %v996, 0.001953125
  %v1137 = vmul.f32 %v1001, 0.001953125
  %v1138 = vmul.f32 %v1006, 0.001953125
  %v1139 = vmul.f32 %v1011, 0.001953125
  %v1140 = vmul.f32 %v1016, 0.001953125
  %v1141 = vmul.f32 %v1021, 0.001953125
  %v1142 = vmul.f32 %v1026, 0.001953125
  %v1143 = vmul.f32 %v1031, 0.001953125
  %v1144 = vmul.f32 %v1036, 0.001953125
  %v1145 = vmul.f32 %v1041, 0.001953125
  %v1146 = vmul.f32 %v1046, 0.001953125
  %v1147 = vmul.f32 %v1051, 0.001953125
  %v1148 = vmul.f32 %v1056, 0.001953125
  %v1149 = vmul.f32 %v1061, 0.001953125
  %v1150 = vmul.f32 %v1066, 0.001953125
  %v1151 = vmul.f32 %v1071, 0.001953125
  %v1152 = vmul.f32 %v1076, 0.001953125
  %v1153 = vmul.f32 %v1081, 0.001953125
  %v1154 = vmul.f32 %v1086, 0.001953125
  %v1155 = vmul.f32 %v1091, 0.001953125
  %v1156 = vmul.f32 %v1092, %v1092
  %v1157 = vmul.f32 %v1093, %v1093
  %v1158 = vmul.f32 %v1094, %v1094
  %v1159 = vmul.f32 %v1095, %v1095
  %v1160 = vmul.f32 %v1096, %v1096
  %v1161 = vmul.f32 %v1097, %v1097
  %v1162 = vmul.f32 %v1098, %v1098
  %v1163 = vmul.f32 %v1099, %v1099
  %v1164 = vmul.f32 %v1100, %v1100
  %v1165 = vmul.f32 %v1101, %v1101
  %v1166 = vmul.f32 %v1102, %v1102
  %v1167 = vmul.f32 %v1103, %v1103
  %v1168 = vmul.f32 %v1104, %v1104
  %v1169 = vmul.f32 %v1105, %v1105
  %v1170 = vmul.f32 %v1106, %v1106
  %v1171 = vmul.f32 %v1107, %v1107
  %v1172 = vmul.f32 %v1108, %v1108
  %v1173 = vmul.f32 %v1109, %v1109
  %v1174 = vmul.f32 %v1110, %v1110
  %v1175 = vmul.f32 %v1111, %v1111
  %v1176 = vmul.f32 %v1112, %v1112
  %v1177 = vmul.f32 %v1113, %v1113
  %v1178 = vmul.f32 %v1114, %v1114
  %v1179 = vmul.f32 %v1115, %v1115
  %v1180 = vmul.f32 %v1116, %v1116
  %v1181 = vmul.f32 %v1117, %v1117
  %v1182 = vmul.f32 %v1118, %v1118
  %v1183 = vmul.f32 %v1119, %v1119
  %v1184 = vmul.f32 %v1120, %v1120
  %v1185 = vmul.f32 %v1121, %v1121
  %v1186 = vmul.f32 %v1122, %v1122
  %v1187 = vmul.f32 %v1123, %v1123
  %v1188 = vsub.f32 %v1124, %v1156
  %v1189 = vsub.f32 %v1125, %v1157
  %v1190 = vsub.f32 %v1126, %v1158
  %v1191 = vsub.f32 %v1127, %v1159
  %v1192 = vsub.f32 %v1128, %v1160
  %v1193 = vsub.f32 %v1129, %v1161
  %v1194 = vsub.f32 %v1130, %v1162
  %v1195 = vsub.f32 %v1131, %v1163
  %v1196 = vsub.f32 %v1132, %v1164
  %v1197 = vsub.f32 %v1133, %v1165
  %v1198 = vsub.f32 %v1134, %v1166
  %v1199 = vsub.f32 %v1135, %v1167
  %v1200 = vsub.f32 %v1136, %v1168
  %v1201 = vsub.f32 %v1137, %v1169
  %v1202 = vsub.f32 %v1138, %v1170
  %v1203 = vsub.f32 %v1139, %v1171
  %v1204 = vsub.f32 %v1140, %v1172
  %v1205 = vsub.f32 %v1141, %v1173
  %v1206 = vsub.f32 %v1142, %v1174
  %v1207 = vsub.f32 %v1143, %v1175
  %v1208 = vsub.f32 %v1144, %v1176
  %v1209 = vsub.f32 %v1145, %v1177
  %v1210 = vsub.f32 %v1146, %v1178
  %v1211 = vsub.f32 %v1147, %v1179
  %v1212 = vsub.f32 %v1148, %v1180
  %v1213 = vsub.f32 %v1149, %v1181
  %v1214 = vsub.f32 %v1150, %v1182
  %v1215 = vsub.f32 %v1151, %v1183
  %v1216 = vsub.f32 %v1152, %v1184
  %v1217 = vsub.f32 %v1153, %v1185
  %v1218 = vsub.f32 %v1154, %v1186
  %v1219 = vsub.f32 %v1155, %v1187
  %v1220 = vmax.f32 %v1188, 0.0
  %v1221 = vmax.f32 %v1189, 0.0
  %v1222 = vmax.f32 %v1190, 0.0
  %v1223 = vmax.f32 %v1191, 0.0
  %v1224 = vmax.f32 %v1192, 0.0
  %v1225 = vmax.f32 %v1193, 0.0
  %v1226 = vmax.f32 %v1194, 0.0
  %v1227 = vmax.f32 %v1195, 0.0
  %v1228 = vmax.f32 %v1196, 0.0
  %v1229 = vmax.f32 %v1197, 0.0
  %v1230 = vmax.f32 %v1198, 0.0
  %v1231 = vmax.f32 %v1199, 0.0
  %v1232 = vmax.f32 %v1200, 0.0
  %v1233 = vmax.f32 %v1201, 0.0
  %v1234 = vmax.f32 %v1202, 0.0
  %v1235 = vmax.f32 %v1203, 0.0
  %v1236 = vmax.f32 %v1204, 0.0
  %v1237 = vmax.f32 %v1205, 0.0
  %v1238 = vmax.f32 %v1206, 0.0
  %v1239 = vmax.f32 %v1207, 0.0
  %v1240 = vmax.f32 %v1208, 0.0
  %v1241 = vmax.f32 %v1209, 0.0
  %v1242 = vmax.f32 %v1210, 0.0
  %v1243 = vmax.f32 %v1211, 0.0
  %v1244 = vmax.f32 %v1212, 0.0
  %v1245 = vmax.f32 %v1213, 0.0
  %v1246 = vmax.f32 %v1214, 0.0
  %v1247 = vmax.f32 %v1215, 0.0
  %v1248 = vmax.f32 %v1216, 0.0
  %v1249 = vmax.f32 %v1217, 0.0
  %v1250 = vmax.f32 %v1218, 0.0
  %v1251 = vmax.f32 %v1219, 0.0
  %v1252 = vld [vmem:[%s2] sm:$0xff]
  %v1253 = vld [vmem:[%s2 + $0x8] sm:$0xff]
  %v1254 = vld [vmem:[%s2 + $0x10] sm:$0xff]
  %v1255 = vld [vmem:[%s2 + $0x18] sm:$0xff]
  %v1256 = vld [vmem:[%s2 + $0x20] sm:$0xff]
  %v1257 = vld [vmem:[%s2 + $0x28] sm:$0xff]
  %v1258 = vld [vmem:[%s2 + $0x30] sm:$0xff]
  %v1259 = vld [vmem:[%s2 + $0x38] sm:$0xff]
  %v1260 = vld [vmem:[%s2 + $0x40] sm:$0xff]
  %v1261 = vld [vmem:[%s2 + $0x48] sm:$0xff]
  %v1262 = vld [vmem:[%s2 + $0x50] sm:$0xff]
  %v1263 = vld [vmem:[%s2 + $0x58] sm:$0xff]
  %v1264 = vld [vmem:[%s2 + $0x60] sm:$0xff]
  %v1265 = vld [vmem:[%s2 + $0x68] sm:$0xff]
  %v1266 = vld [vmem:[%s2 + $0x70] sm:$0xff]
  %v1267 = vld [vmem:[%s2 + $0x78] sm:$0xff]
  %v1268 = vld [vmem:[%s2 + $0x80] sm:$0xff]
  %v1269 = vld [vmem:[%s2 + $0x88] sm:$0xff]
  %v1270 = vld [vmem:[%s2 + $0x90] sm:$0xff]
  %v1271 = vld [vmem:[%s2 + $0x98] sm:$0xff]
  %v1272 = vld [vmem:[%s2 + $0xa0] sm:$0xff]
  %v1273 = vld [vmem:[%s2 + $0xa8] sm:$0xff]
  %v1274 = vld [vmem:[%s2 + $0xb0] sm:$0xff]
  %v1275 = vld [vmem:[%s2 + $0xb8] sm:$0xff]
  %v1276 = vld [vmem:[%s2 + $0xc0] sm:$0xff]
  %v1277 = vld [vmem:[%s2 + $0xc8] sm:$0xff]
  %v1278 = vld [vmem:[%s2 + $0xd0] sm:$0xff]
  %v1279 = vld [vmem:[%s2 + $0xd8] sm:$0xff]
  %v1280 = vld [vmem:[%s2 + $0xe0] sm:$0xff]
  %v1281 = vld [vmem:[%s2 + $0xe8] sm:$0xff]
  %v1282 = vld [vmem:[%s2 + $0xf0] sm:$0xff]
  %v1283 = vld [vmem:[%s2 + $0xf8] sm:$0xff]
  %v1284 = vadd.f32 %v1220, 1e-05
  %v1285 = vadd.f32 %v1221, 1e-05
  %v1286 = vadd.f32 %v1222, 1e-05
  %v1287 = vadd.f32 %v1223, 1e-05
  %v1288 = vadd.f32 %v1224, 1e-05
  %v1289 = vadd.f32 %v1225, 1e-05
  %v1290 = vadd.f32 %v1226, 1e-05
  %v1291 = vadd.f32 %v1227, 1e-05
  %v1292 = vadd.f32 %v1228, 1e-05
  %v1293 = vadd.f32 %v1229, 1e-05
  %v1294 = vadd.f32 %v1230, 1e-05
  %v1295 = vadd.f32 %v1231, 1e-05
  %v1296 = vadd.f32 %v1232, 1e-05
  %v1297 = vadd.f32 %v1233, 1e-05
  %v1298 = vadd.f32 %v1234, 1e-05
  %v1299 = vadd.f32 %v1235, 1e-05
  %v1300 = vadd.f32 %v1236, 1e-05
  %v1301 = vadd.f32 %v1237, 1e-05
  %v1302 = vadd.f32 %v1238, 1e-05
  %v1303 = vadd.f32 %v1239, 1e-05
  %v1304 = vadd.f32 %v1240, 1e-05
  %v1305 = vadd.f32 %v1241, 1e-05
  %v1306 = vadd.f32 %v1242, 1e-05
  %v1307 = vadd.f32 %v1243, 1e-05
  %v1308 = vadd.f32 %v1244, 1e-05
  %v1309 = vadd.f32 %v1245, 1e-05
  %v1310 = vadd.f32 %v1246, 1e-05
  %v1311 = vadd.f32 %v1247, 1e-05
  %v1312 = vadd.f32 %v1248, 1e-05
  %v1313 = vadd.f32 %v1249, 1e-05
  %v1314 = vadd.f32 %v1250, 1e-05
  %v1315 = vadd.f32 %v1251, 1e-05
  %v1316 = vrsqrt.pop %v1284
  %v1317 = vrsqrt.pop %v1285
  %v1318 = vrsqrt.pop %v1286
  %v1319 = vrsqrt.pop %v1287
  %v1320 = vrsqrt.pop %v1288
  %v1321 = vrsqrt.pop %v1289
  %v1322 = vrsqrt.pop %v1290
  %v1323 = vrsqrt.pop %v1291
  %v1324 = vrsqrt.pop %v1292
  %v1325 = vrsqrt.pop %v1293
  %v1326 = vrsqrt.pop %v1294
  %v1327 = vrsqrt.pop %v1295
  %v1328 = vrsqrt.pop %v1296
  %v1329 = vrsqrt.pop %v1297
  %v1330 = vrsqrt.pop %v1298
  %v1331 = vrsqrt.pop %v1299
  %v1332 = vrsqrt.pop %v1300
  %v1333 = vrsqrt.pop %v1301
  %v1334 = vrsqrt.pop %v1302
  %v1335 = vrsqrt.pop %v1303
  %v1336 = vrsqrt.pop %v1304
  %v1337 = vrsqrt.pop %v1305
  %v1338 = vrsqrt.pop %v1306
  %v1339 = vrsqrt.pop %v1307
  %v1340 = vrsqrt.pop %v1308
  %v1341 = vrsqrt.pop %v1309
  %v1342 = vrsqrt.pop %v1310
  %v1343 = vrsqrt.pop %v1311
  %v1344 = vrsqrt.pop %v1312
  %v1345 = vrsqrt.pop %v1313
  %v1346 = vrsqrt.pop %v1314
  %v1347 = vrsqrt.pop %v1315
  %v1348 = vmul.f32 %v1252, %v1316
  %v1349 = vmul.f32 %v1253, %v1317
  %v1350 = vmul.f32 %v1254, %v1318
  %v1351 = vmul.f32 %v1255, %v1319
  %v1352 = vmul.f32 %v1256, %v1320
  %v1353 = vmul.f32 %v1257, %v1321
  %v1354 = vmul.f32 %v1258, %v1322
  %v1355 = vmul.f32 %v1259, %v1323
  %v1356 = vmul.f32 %v1260, %v1324
  %v1357 = vmul.f32 %v1261, %v1325
  %v1358 = vmul.f32 %v1262, %v1326
  %v1359 = vmul.f32 %v1263, %v1327
  %v1360 = vmul.f32 %v1264, %v1328
  %v1361 = vmul.f32 %v1265, %v1329
  %v1362 = vmul.f32 %v1266, %v1330
  %v1363 = vmul.f32 %v1267, %v1331
  %v1364 = vmul.f32 %v1268, %v1332
  %v1365 = vmul.f32 %v1269, %v1333
  %v1366 = vmul.f32 %v1270, %v1334
  %v1367 = vmul.f32 %v1271, %v1335
  %v1368 = vmul.f32 %v1272, %v1336
  %v1369 = vmul.f32 %v1273, %v1337
  %v1370 = vmul.f32 %v1274, %v1338
  %v1371 = vmul.f32 %v1275, %v1339
  %v1372 = vmul.f32 %v1276, %v1340
  %v1373 = vmul.f32 %v1277, %v1341
  %v1374 = vmul.f32 %v1278, %v1342
  %v1375 = vmul.f32 %v1279, %v1343
  %v1376 = vmul.f32 %v1280, %v1344
  %v1377 = vmul.f32 %v1281, %v1345
  %v1378 = vmul.f32 %v1282, %v1346
  %v1379 = vmul.f32 %v1283, %v1347
  %v1380 = vld [vmem:[%s3] sm:$0xff]
  %v1381 = vld [vmem:[%s3 + $0x8] sm:$0xff]
  %v1382 = vld [vmem:[%s3 + $0x10] sm:$0xff]
  %v1383 = vld [vmem:[%s3 + $0x18] sm:$0xff]
  %v1384 = vld [vmem:[%s3 + $0x20] sm:$0xff]
  %v1385 = vld [vmem:[%s3 + $0x28] sm:$0xff]
  %v1386 = vld [vmem:[%s3 + $0x30] sm:$0xff]
  %v1387 = vld [vmem:[%s3 + $0x38] sm:$0xff]
  %v1388 = vld [vmem:[%s3 + $0x40] sm:$0xff]
  %v1389 = vld [vmem:[%s3 + $0x48] sm:$0xff]
  %v1390 = vld [vmem:[%s3 + $0x50] sm:$0xff]
  %v1391 = vld [vmem:[%s3 + $0x58] sm:$0xff]
  %v1392 = vld [vmem:[%s3 + $0x60] sm:$0xff]
  %v1393 = vld [vmem:[%s3 + $0x68] sm:$0xff]
  %v1394 = vld [vmem:[%s3 + $0x70] sm:$0xff]
  %v1395 = vld [vmem:[%s3 + $0x78] sm:$0xff]
  %v1396 = vld [vmem:[%s3 + $0x80] sm:$0xff]
  %v1397 = vld [vmem:[%s3 + $0x88] sm:$0xff]
  %v1398 = vld [vmem:[%s3 + $0x90] sm:$0xff]
  %v1399 = vld [vmem:[%s3 + $0x98] sm:$0xff]
  %v1400 = vld [vmem:[%s3 + $0xa0] sm:$0xff]
  %v1401 = vld [vmem:[%s3 + $0xa8] sm:$0xff]
  %v1402 = vld [vmem:[%s3 + $0xb0] sm:$0xff]
  %v1403 = vld [vmem:[%s3 + $0xb8] sm:$0xff]
  %v1404 = vld [vmem:[%s3 + $0xc0] sm:$0xff]
  %v1405 = vld [vmem:[%s3 + $0xc8] sm:$0xff]
  %v1406 = vld [vmem:[%s3 + $0xd0] sm:$0xff]
  %v1407 = vld [vmem:[%s3 + $0xd8] sm:$0xff]
  %v1408 = vld [vmem:[%s3 + $0xe0] sm:$0xff]
  %v1409 = vld [vmem:[%s3 + $0xe8] sm:$0xff]
  %v1410 = vld [vmem:[%s3 + $0xf0] sm:$0xff]
  %v1411 = vld [vmem:[%s3 + $0xf8] sm:$0xff]
  %v1412 = vmul.f32 %v1092, %v1348
  %v1413 = vmul.f32 %v1093, %v1349
  %v1414 = vmul.f32 %v1094, %v1350
  %v1415 = vmul.f32 %v1095, %v1351
  %v1416 = vmul.f32 %v1096, %v1352
  %v1417 = vmul.f32 %v1097, %v1353
  %v1418 = vmul.f32 %v1098, %v1354
  %v1419 = vmul.f32 %v1099, %v1355
  %v1420 = vmul.f32 %v1100, %v1356
  %v1421 = vmul.f32 %v1101, %v1357
  %v1422 = vmul.f32 %v1102, %v1358
  %v1423 = vmul.f32 %v1103, %v1359
  %v1424 = vmul.f32 %v1104, %v1360
  %v1425 = vmul.f32 %v1105, %v1361
  %v1426 = vmul.f32 %v1106, %v1362
  %v1427 = vmul.f32 %v1107, %v1363
  %v1428 = vmul.f32 %v1108, %v1364
  %v1429 = vmul.f32 %v1109, %v1365
  %v1430 = vmul.f32 %v1110, %v1366
  %v1431 = vmul.f32 %v1111, %v1367
  %v1432 = vmul.f32 %v1112, %v1368
  %v1433 = vmul.f32 %v1113, %v1369
  %v1434 = vmul.f32 %v1114, %v1370
  %v1435 = vmul.f32 %v1115, %v1371
  %v1436 = vmul.f32 %v1116, %v1372
  %v1437 = vmul.f32 %v1117, %v1373
  %v1438 = vmul.f32 %v1118, %v1374
  %v1439 = vmul.f32 %v1119, %v1375
  %v1440 = vmul.f32 %v1120, %v1376
  %v1441 = vmul.f32 %v1121, %v1377
  %v1442 = vmul.f32 %v1122, %v1378
  %v1443 = vmul.f32 %v1123, %v1379
  %v1444 = vsub.f32 %v1380, %v1412
  %v1445 = vsub.f32 %v1381, %v1413
  %v1446 = vsub.f32 %v1382, %v1414
  %v1447 = vsub.f32 %v1383, %v1415
  %v1448 = vsub.f32 %v1384, %v1416
  %v1449 = vsub.f32 %v1385, %v1417
  %v1450 = vsub.f32 %v1386, %v1418
  %v1451 = vsub.f32 %v1387, %v1419
  %v1452 = vsub.f32 %v1388, %v1420
  %v1453 = vsub.f32 %v1389, %v1421
  %v1454 = vsub.f32 %v1390, %v1422
  %v1455 = vsub.f32 %v1391, %v1423
  %v1456 = vsub.f32 %v1392, %v1424
  %v1457 = vsub.f32 %v1393, %v1425
  %v1458 = vsub.f32 %v1394, %v1426
  %v1459 = vsub.f32 %v1395, %v1427
  %v1460 = vsub.f32 %v1396, %v1428
  %v1461 = vsub.f32 %v1397, %v1429
  %v1462 = vsub.f32 %v1398, %v1430
  %v1463 = vsub.f32 %v1399, %v1431
  %v1464 = vsub.f32 %v1400, %v1432
  %v1465 = vsub.f32 %v1401, %v1433
  %v1466 = vsub.f32 %v1402, %v1434
  %v1467 = vsub.f32 %v1403, %v1435
  %v1468 = vsub.f32 %v1404, %v1436
  %v1469 = vsub.f32 %v1405, %v1437
  %v1470 = vsub.f32 %v1406, %v1438
  %v1471 = vsub.f32 %v1407, %v1439
  %v1472 = vsub.f32 %v1408, %v1440
  %v1473 = vsub.f32 %v1409, %v1441
  %v1474 = vsub.f32 %v1410, %v1442
  %v1475 = vsub.f32 %v1411, %v1443
  %1477 = vset.pattern.permute.xlu0 0
  %1478 = vperm.xlu0 %1477, %v1348
  %v1479 = vpop.permute.xlu0 %1478
  %1482 = vset.pattern.permute.xlu0 0
  %1483 = vperm.xlu0 %1482, %v1349
  %v1484 = vpop.permute.xlu0 %1483
  %1487 = vset.pattern.permute.xlu0 0
  %1488 = vperm.xlu0 %1487, %v1350
  %v1489 = vpop.permute.xlu0 %1488
  %1492 = vset.pattern.permute.xlu0 0
  %1493 = vperm.xlu0 %1492, %v1351
  %v1494 = vpop.permute.xlu0 %1493
  %1497 = vset.pattern.permute.xlu0 0
  %1498 = vperm.xlu0 %1497, %v1352
  %v1499 = vpop.permute.xlu0 %1498
  %1502 = vset.pattern.permute.xlu0 0
  %1503 = vperm.xlu0 %1502, %v1353
  %v1504 = vpop.permute.xlu0 %1503
  %1507 = vset.pattern.permute.xlu0 0
  %1508 = vperm.xlu0 %1507, %v1354
  %v1509 = vpop.permute.xlu0 %1508
  %1512 = vset.pattern.permute.xlu0 0
  %1513 = vperm.xlu0 %1512, %v1355
  %v1514 = vpop.permute.xlu0 %1513
  %1517 = vset.pattern.permute.xlu0 0
  %1518 = vperm.xlu0 %1517, %v1356
  %v1519 = vpop.permute.xlu0 %1518
  %1522 = vset.pattern.permute.xlu0 0
  %1523 = vperm.xlu0 %1522, %v1357
  %v1524 = vpop.permute.xlu0 %1523
  %1527 = vset.pattern.permute.xlu0 0
  %1528 = vperm.xlu0 %1527, %v1358
  %v1529 = vpop.permute.xlu0 %1528
  %1532 = vset.pattern.permute.xlu0 0
  %1533 = vperm.xlu0 %1532, %v1359
  %v1534 = vpop.permute.xlu0 %1533
  %1537 = vset.pattern.permute.xlu0 0
  %1538 = vperm.xlu0 %1537, %v1360
  %v1539 = vpop.permute.xlu0 %1538
  %1542 = vset.pattern.permute.xlu0 0
  %1543 = vperm.xlu0 %1542, %v1361
  %v1544 = vpop.permute.xlu0 %1543
  %1547 = vset.pattern.permute.xlu0 0
  %1548 = vperm.xlu0 %1547, %v1362
  %v1549 = vpop.permute.xlu0 %1548
  %1552 = vset.pattern.permute.xlu0 0
  %1553 = vperm.xlu0 %1552, %v1363
  %v1554 = vpop.permute.xlu0 %1553
  %1557 = vset.pattern.permute.xlu0 0
  %1558 = vperm.xlu0 %1557, %v1364
  %v1559 = vpop.permute.xlu0 %1558
  %1562 = vset.pattern.permute.xlu0 0
  %1563 = vperm.xlu0 %1562, %v1365
  %v1564 = vpop.permute.xlu0 %1563
  %1567 = vset.pattern.permute.xlu0 0
  %1568 = vperm.xlu0 %1567, %v1366
  %v1569 = vpop.permute.xlu0 %1568
  %1572 = vset.pattern.permute.xlu0 0
  %1573 = vperm.xlu0 %1572, %v1367
  %v1574 = vpop.permute.xlu0 %1573
  %1577 = vset.pattern.permute.xlu0 0
  %1578 = vperm.xlu0 %1577, %v1368
  %v1579 = vpop.permute.xlu0 %1578
  %1582 = vset.pattern.permute.xlu0 0
  %1583 = vperm.xlu0 %1582, %v1369
  %v1584 = vpop.permute.xlu0 %1583
  %1587 = vset.pattern.permute.xlu0 0
  %1588 = vperm.xlu0 %1587, %v1370
  %v1589 = vpop.permute.xlu0 %1588
  %1592 = vset.pattern.permute.xlu0 0
  %1593 = vperm.xlu0 %1592, %v1371
  %v1594 = vpop.permute.xlu0 %1593
  %1597 = vset.pattern.permute.xlu0 0
  %1598 = vperm.xlu0 %1597, %v1372
  %v1599 = vpop.permute.xlu0 %1598
  %1602 = vset.pattern.permute.xlu0 0
  %1603 = vperm.xlu0 %1602, %v1373
  %v1604 = vpop.permute.xlu0 %1603
  %1607 = vset.pattern.permute.xlu0 0
  %1608 = vperm.xlu0 %1607, %v1374
  %v1609 = vpop.permute.xlu0 %1608
  %1612 = vset.pattern.permute.xlu0 0
  %1613 = vperm.xlu0 %1612, %v1375
  %v1614 = vpop.permute.xlu0 %1613
  %1617 = vset.pattern.permute.xlu0 0
  %1618 = vperm.xlu0 %1617, %v1376
  %v1619 = vpop.permute.xlu0 %1618
  %1622 = vset.pattern.permute.xlu0 0
  %1623 = vperm.xlu0 %1622, %v1377
  %v1624 = vpop.permute.xlu0 %1623
  %1627 = vset.pattern.permute.xlu0 0
  %1628 = vperm.xlu0 %1627, %v1378
  %v1629 = vpop.permute.xlu0 %1628
  %1632 = vset.pattern.permute.xlu0 0
  %1633 = vperm.xlu0 %1632, %v1379
  %v1634 = vpop.permute.xlu0 %1633
  %v1636 = vmul.f32 %v293, %v1479
  %v1637 = vmul.f32 %v295, %v1479
  %v1638 = vmul.f32 %v486, %v1479
  %v1639 = vmul.f32 %v488, %v1479
  %v1640 = vmul.f32 %v297, %v1484
  %v1641 = vmul.f32 %v299, %v1484
  %v1642 = vmul.f32 %v490, %v1484
  %v1643 = vmul.f32 %v492, %v1484
  %v1644 = vmul.f32 %v303, %v1489
  %v1645 = vmul.f32 %v305, %v1489
  %v1646 = vmul.f32 %v496, %v1489
  %v1647 = vmul.f32 %v498, %v1489
  %v1648 = vmul.f32 %v307, %v1494
  %v1649 = vmul.f32 %v309, %v1494
  %v1650 = vmul.f32 %v500, %v1494
  %v1651 = vmul.f32 %v502, %v1494
  %v1652 = vmul.f32 %v313, %v1499
  %v1653 = vmul.f32 %v315, %v1499
  %v1654 = vmul.f32 %v506, %v1499
  %v1655 = vmul.f32 %v508, %v1499
  %v1656 = vmul.f32 %v317, %v1504
  %v1657 = vmul.f32 %v319, %v1504
  %v1658 = vmul.f32 %v510, %v1504
  %v1659 = vmul.f32 %v512, %v1504
  %v1660 = vmul.f32 %v323, %v1509
  %v1661 = vmul.f32 %v325, %v1509
  %v1662 = vmul.f32 %v516, %v1509
  %v1663 = vmul.f32 %v518, %v1509
  %v1664 = vmul.f32 %v327, %v1514
  %v1665 = vmul.f32 %v329, %v1514
  %v1666 = vmul.f32 %v520, %v1514
  %v1667 = vmul.f32 %v522, %v1514
  %v1668 = vmul.f32 %v333, %v1519
  %v1669 = vmul.f32 %v335, %v1519
  %v1670 = vmul.f32 %v526, %v1519
  %v1671 = vmul.f32 %v528, %v1519
  %v1672 = vmul.f32 %v337, %v1524
  %v1673 = vmul.f32 %v339, %v1524
  %v1674 = vmul.f32 %v530, %v1524
  %v1675 = vmul.f32 %v532, %v1524
  %v1676 = vmul.f32 %v343, %v1529
  %v1677 = vmul.f32 %v345, %v1529
  %v1678 = vmul.f32 %v536, %v1529
  %v1679 = vmul.f32 %v538, %v1529
  %v1680 = vmul.f32 %v347, %v1534
  %v1681 = vmul.f32 %v349, %v1534
  %v1682 = vmul.f32 %v540, %v1534
  %v1683 = vmul.f32 %v542, %v1534
  %v1684 = vmul.f32 %v353, %v1539
  %v1685 = vmul.f32 %v355, %v1539
  %v1686 = vmul.f32 %v546, %v1539
  %v1687 = vmul.f32 %v548, %v1539
  %v1688 = vmul.f32 %v357, %v1544
  %v1689 = vmul.f32 %v359, %v1544
  %v1690 = vmul.f32 %v550, %v1544
  %v1691 = vmul.f32 %v552, %v1544
  %v1692 = vmul.f32 %v363, %v1549
  %v1693 = vmul.f32 %v365, %v1549
  %v1694 = vmul.f32 %v556, %v1549
  %v1695 = vmul.f32 %v558, %v1549
  %v1696 = vmul.f32 %v367, %v1554
  %v1697 = vmul.f32 %v369, %v1554
  %v1698 = vmul.f32 %v560, %v1554
  %v1699 = vmul.f32 %v562, %v1554
  %v1700 = vmul.f32 %v373, %v1559
  %v1701 = vmul.f32 %v375, %v1559
  %v1702 = vmul.f32 %v566, %v1559
  %v1703 = vmul.f32 %v568, %v1559
  %v1704 = vmul.f32 %v377, %v1564
  %v1705 = vmul.f32 %v379, %v1564
  %v1706 = vmul.f32 %v570, %v1564
  %v1707 = vmul.f32 %v572, %v1564
  %v1708 = vmul.f32 %v383, %v1569
  %v1709 = vmul.f32 %v385, %v1569
  %v1710 = vmul.f32 %v576, %v1569
  %v1711 = vmul.f32 %v578, %v1569
  %v1712 = vmul.f32 %v387, %v1574
  %v1713 = vmul.f32 %v389, %v1574
  %v1714 = vmul.f32 %v580, %v1574
  %v1715 = vmul.f32 %v582, %v1574
  %v1716 = vmul.f32 %v393, %v1579
  %v1717 = vmul.f32 %v395, %v1579
  %v1718 = vmul.f32 %v586, %v1579
  %v1719 = vmul.f32 %v588, %v1579
  %v1720 = vmul.f32 %v397, %v1584
  %v1721 = vmul.f32 %v399, %v1584
  %v1722 = vmul.f32 %v590, %v1584
  %v1723 = vmul.f32 %v592, %v1584
  %v1724 = vmul.f32 %v403, %v1589
  %v1725 = vmul.f32 %v405, %v1589
  %v1726 = vmul.f32 %v596, %v1589
  %v1727 = vmul.f32 %v598, %v1589
  %v1728 = vmul.f32 %v407, %v1594
  %v1729 = vmul.f32 %v409, %v1594
  %v1730 = vmul.f32 %v600, %v1594
  %v1731 = vmul.f32 %v602, %v1594
  %v1732 = vmul.f32 %v413, %v1599
  %v1733 = vmul.f32 %v415, %v1599
  %v1734 = vmul.f32 %v606, %v1599
  %v1735 = vmul.f32 %v608, %v1599
  %v1736 = vmul.f32 %v417, %v1604
  %v1737 = vmul.f32 %v419, %v1604
  %v1738 = vmul.f32 %v610, %v1604
  %v1739 = vmul.f32 %v612, %v1604
  %v1740 = vmul.f32 %v423, %v1609
  %v1741 = vmul.f32 %v425, %v1609
  %v1742 = vmul.f32 %v616, %v1609
  %v1743 = vmul.f32 %v618, %v1609
  %v1744 = vmul.f32 %v427, %v1614
  %v1745 = vmul.f32 %v429, %v1614
  %v1746 = vmul.f32 %v620, %v1614
  %v1747 = vmul.f32 %v622, %v1614
  %v1748 = vmul.f32 %v433, %v1619
  %v1749 = vmul.f32 %v435, %v1619
  %v1750 = vmul.f32 %v626, %v1619
  %v1751 = vmul.f32 %v628, %v1619
  %v1752 = vmul.f32 %v437, %v1624
  %v1753 = vmul.f32 %v439, %v1624
  %v1754 = vmul.f32 %v630, %v1624
  %v1755 = vmul.f32 %v632, %v1624
  %v1756 = vmul.f32 %v443, %v1629
  %v1757 = vmul.f32 %v445, %v1629
  %v1758 = vmul.f32 %v636, %v1629
  %v1759 = vmul.f32 %v638, %v1629
  %v1760 = vmul.f32 %v447, %v1634
  %v1761 = vmul.f32 %v449, %v1634
  %v1762 = vmul.f32 %v640, %v1634
  %v1763 = vmul.f32 %v642, %v1634
  %1765 = vset.pattern.permute.xlu0 0
  %1766 = vperm.xlu0 %1765, %v1444
  %v1767 = vpop.permute.xlu0 %1766
  %1770 = vset.pattern.permute.xlu0 0
  %1771 = vperm.xlu0 %1770, %v1445
  %v1772 = vpop.permute.xlu0 %1771
  %1775 = vset.pattern.permute.xlu0 0
  %1776 = vperm.xlu0 %1775, %v1446
  %v1777 = vpop.permute.xlu0 %1776
  %1780 = vset.pattern.permute.xlu0 0
  %1781 = vperm.xlu0 %1780, %v1447
  %v1782 = vpop.permute.xlu0 %1781
  %1785 = vset.pattern.permute.xlu0 0
  %1786 = vperm.xlu0 %1785, %v1448
  %v1787 = vpop.permute.xlu0 %1786
  %1790 = vset.pattern.permute.xlu0 0
  %1791 = vperm.xlu0 %1790, %v1449
  %v1792 = vpop.permute.xlu0 %1791
  %1795 = vset.pattern.permute.xlu0 0
  %1796 = vperm.xlu0 %1795, %v1450
  %v1797 = vpop.permute.xlu0 %1796
  %1800 = vset.pattern.permute.xlu0 0
  %1801 = vperm.xlu0 %1800, %v1451
  %v1802 = vpop.permute.xlu0 %1801
  %1805 = vset.pattern.permute.xlu0 0
  %1806 = vperm.xlu0 %1805, %v1452
  %v1807 = vpop.permute.xlu0 %1806
  %1810 = vset.pattern.permute.xlu0 0
  %1811 = vperm.xlu0 %1810, %v1453
  %v1812 = vpop.permute.xlu0 %1811
  %1815 = vset.pattern.permute.xlu0 0
  %1816 = vperm.xlu0 %1815, %v1454
  %v1817 = vpop.permute.xlu0 %1816
  %1820 = vset.pattern.permute.xlu0 0
  %1821 = vperm.xlu0 %1820, %v1455
  %v1822 = vpop.permute.xlu0 %1821
  %1825 = vset.pattern.permute.xlu0 0
  %1826 = vperm.xlu0 %1825, %v1456
  %v1827 = vpop.permute.xlu0 %1826
  %1830 = vset.pattern.permute.xlu0 0
  %1831 = vperm.xlu0 %1830, %v1457
  %v1832 = vpop.permute.xlu0 %1831
  %1835 = vset.pattern.permute.xlu0 0
  %1836 = vperm.xlu0 %1835, %v1458
  %v1837 = vpop.permute.xlu0 %1836
  %1840 = vset.pattern.permute.xlu0 0
  %1841 = vperm.xlu0 %1840, %v1459
  %v1842 = vpop.permute.xlu0 %1841
  %1845 = vset.pattern.permute.xlu0 0
  %1846 = vperm.xlu0 %1845, %v1460
  %v1847 = vpop.permute.xlu0 %1846
  %1850 = vset.pattern.permute.xlu0 0
  %1851 = vperm.xlu0 %1850, %v1461
  %v1852 = vpop.permute.xlu0 %1851
  %1855 = vset.pattern.permute.xlu0 0
  %1856 = vperm.xlu0 %1855, %v1462
  %v1857 = vpop.permute.xlu0 %1856
  %1860 = vset.pattern.permute.xlu0 0
  %1861 = vperm.xlu0 %1860, %v1463
  %v1862 = vpop.permute.xlu0 %1861
  %1865 = vset.pattern.permute.xlu0 0
  %1866 = vperm.xlu0 %1865, %v1464
  %v1867 = vpop.permute.xlu0 %1866
  %1870 = vset.pattern.permute.xlu0 0
  %1871 = vperm.xlu0 %1870, %v1465
  %v1872 = vpop.permute.xlu0 %1871
  %1875 = vset.pattern.permute.xlu0 0
  %1876 = vperm.xlu0 %1875, %v1466
  %v1877 = vpop.permute.xlu0 %1876
  %1880 = vset.pattern.permute.xlu0 0
  %1881 = vperm.xlu0 %1880, %v1467
  %v1882 = vpop.permute.xlu0 %1881
  %1885 = vset.pattern.permute.xlu0 0
  %1886 = vperm.xlu0 %1885, %v1468
  %v1887 = vpop.permute.xlu0 %1886
  %1890 = vset.pattern.permute.xlu0 0
  %1891 = vperm.xlu0 %1890, %v1469
  %v1892 = vpop.permute.xlu0 %1891
  %1895 = vset.pattern.permute.xlu0 0
  %1896 = vperm.xlu0 %1895, %v1470
  %v1897 = vpop.permute.xlu0 %1896
  %1900 = vset.pattern.permute.xlu0 0
  %1901 = vperm.xlu0 %1900, %v1471
  %v1902 = vpop.permute.xlu0 %1901
  %1905 = vset.pattern.permute.xlu0 0
  %1906 = vperm.xlu0 %1905, %v1472
  %v1907 = vpop.permute.xlu0 %1906
  %1910 = vset.pattern.permute.xlu0 0
  %1911 = vperm.xlu0 %1910, %v1473
  %v1912 = vpop.permute.xlu0 %1911
  %1915 = vset.pattern.permute.xlu0 0
  %1916 = vperm.xlu0 %1915, %v1474
  %v1917 = vpop.permute.xlu0 %1916
  %1920 = vset.pattern.permute.xlu0 0
  %1921 = vperm.xlu0 %1920, %v1475
  %v1922 = vpop.permute.xlu0 %1921
  %v1924 = vadd.f32 %v1636, %v1767
  %v1925 = vadd.f32 %v1637, %v1767
  %v1926 = vadd.f32 %v1638, %v1767
  %v1927 = vadd.f32 %v1639, %v1767
  %v1928 = vadd.f32 %v1640, %v1772
  %v1929 = vadd.f32 %v1641, %v1772
  %v1930 = vadd.f32 %v1642, %v1772
  %v1931 = vadd.f32 %v1643, %v1772
  %v1932 = vadd.f32 %v1644, %v1777
  %v1933 = vadd.f32 %v1645, %v1777
  %v1934 = vadd.f32 %v1646, %v1777
  %v1935 = vadd.f32 %v1647, %v1777
  %v1936 = vadd.f32 %v1648, %v1782
  %v1937 = vadd.f32 %v1649, %v1782
  %v1938 = vadd.f32 %v1650, %v1782
  %v1939 = vadd.f32 %v1651, %v1782
  %v1940 = vadd.f32 %v1652, %v1787
  %v1941 = vadd.f32 %v1653, %v1787
  %v1942 = vadd.f32 %v1654, %v1787
  %v1943 = vadd.f32 %v1655, %v1787
  %v1944 = vadd.f32 %v1656, %v1792
  %v1945 = vadd.f32 %v1657, %v1792
  %v1946 = vadd.f32 %v1658, %v1792
  %v1947 = vadd.f32 %v1659, %v1792
  %v1948 = vadd.f32 %v1660, %v1797
  %v1949 = vadd.f32 %v1661, %v1797
  %v1950 = vadd.f32 %v1662, %v1797
  %v1951 = vadd.f32 %v1663, %v1797
  %v1952 = vadd.f32 %v1664, %v1802
  %v1953 = vadd.f32 %v1665, %v1802
  %v1954 = vadd.f32 %v1666, %v1802
  %v1955 = vadd.f32 %v1667, %v1802
  %v1956 = vadd.f32 %v1668, %v1807
  %v1957 = vadd.f32 %v1669, %v1807
  %v1958 = vadd.f32 %v1670, %v1807
  %v1959 = vadd.f32 %v1671, %v1807
  %v1960 = vadd.f32 %v1672, %v1812
  %v1961 = vadd.f32 %v1673, %v1812
  %v1962 = vadd.f32 %v1674, %v1812
  %v1963 = vadd.f32 %v1675, %v1812
  %v1964 = vadd.f32 %v1676, %v1817
  %v1965 = vadd.f32 %v1677, %v1817
  %v1966 = vadd.f32 %v1678, %v1817
  %v1967 = vadd.f32 %v1679, %v1817
  %v1968 = vadd.f32 %v1680, %v1822
  %v1969 = vadd.f32 %v1681, %v1822
  %v1970 = vadd.f32 %v1682, %v1822
  %v1971 = vadd.f32 %v1683, %v1822
  %v1972 = vadd.f32 %v1684, %v1827
  %v1973 = vadd.f32 %v1685, %v1827
  %v1974 = vadd.f32 %v1686, %v1827
  %v1975 = vadd.f32 %v1687, %v1827
  %v1976 = vadd.f32 %v1688, %v1832
  %v1977 = vadd.f32 %v1689, %v1832
  %v1978 = vadd.f32 %v1690, %v1832
  %v1979 = vadd.f32 %v1691, %v1832
  %v1980 = vadd.f32 %v1692, %v1837
  %v1981 = vadd.f32 %v1693, %v1837
  %v1982 = vadd.f32 %v1694, %v1837
  %v1983 = vadd.f32 %v1695, %v1837
  %v1984 = vadd.f32 %v1696, %v1842
  %v1985 = vadd.f32 %v1697, %v1842
  %v1986 = vadd.f32 %v1698, %v1842
  %v1987 = vadd.f32 %v1699, %v1842
  %v1988 = vadd.f32 %v1700, %v1847
  %v1989 = vadd.f32 %v1701, %v1847
  %v1990 = vadd.f32 %v1702, %v1847
  %v1991 = vadd.f32 %v1703, %v1847
  %v1992 = vadd.f32 %v1704, %v1852
  %v1993 = vadd.f32 %v1705, %v1852
  %v1994 = vadd.f32 %v1706, %v1852
  %v1995 = vadd.f32 %v1707, %v1852
  %v1996 = vadd.f32 %v1708, %v1857
  %v1997 = vadd.f32 %v1709, %v1857
  %v1998 = vadd.f32 %v1710, %v1857
  %v1999 = vadd.f32 %v1711, %v1857
  %v2000 = vadd.f32 %v1712, %v1862
  %v2001 = vadd.f32 %v1713, %v1862
  %v2002 = vadd.f32 %v1714, %v1862
  %v2003 = vadd.f32 %v1715, %v1862
  %v2004 = vadd.f32 %v1716, %v1867
  %v2005 = vadd.f32 %v1717, %v1867
  %v2006 = vadd.f32 %v1718, %v1867
  %v2007 = vadd.f32 %v1719, %v1867
  %v2008 = vadd.f32 %v1720, %v1872
  %v2009 = vadd.f32 %v1721, %v1872
  %v2010 = vadd.f32 %v1722, %v1872
  %v2011 = vadd.f32 %v1723, %v1872
  %v2012 = vadd.f32 %v1724, %v1877
  %v2013 = vadd.f32 %v1725, %v1877
  %v2014 = vadd.f32 %v1726, %v1877
  %v2015 = vadd.f32 %v1727, %v1877
  %v2016 = vadd.f32 %v1728, %v1882
  %v2017 = vadd.f32 %v1729, %v1882
  %v2018 = vadd.f32 %v1730, %v1882
  %v2019 = vadd.f32 %v1731, %v1882
  %v2020 = vadd.f32 %v1732, %v1887
  %v2021 = vadd.f32 %v1733, %v1887
  %v2022 = vadd.f32 %v1734, %v1887
  %v2023 = vadd.f32 %v1735, %v1887
  %v2024 = vadd.f32 %v1736, %v1892
  %v2025 = vadd.f32 %v1737, %v1892
  %v2026 = vadd.f32 %v1738, %v1892
  %v2027 = vadd.f32 %v1739, %v1892
  %v2028 = vadd.f32 %v1740, %v1897
  %v2029 = vadd.f32 %v1741, %v1897
  %v2030 = vadd.f32 %v1742, %v1897
  %v2031 = vadd.f32 %v1743, %v1897
  %v2032 = vadd.f32 %v1744, %v1902
  %v2033 = vadd.f32 %v1745, %v1902
  %v2034 = vadd.f32 %v1746, %v1902
  %v2035 = vadd.f32 %v1747, %v1902
  %v2036 = vadd.f32 %v1748, %v1907
  %v2037 = vadd.f32 %v1749, %v1907
  %v2038 = vadd.f32 %v1750, %v1907
  %v2039 = vadd.f32 %v1751, %v1907
  %v2040 = vadd.f32 %v1752, %v1912
  %v2041 = vadd.f32 %v1753, %v1912
  %v2042 = vadd.f32 %v1754, %v1912
  %v2043 = vadd.f32 %v1755, %v1912
  %v2044 = vadd.f32 %v1756, %v1917
  %v2045 = vadd.f32 %v1757, %v1917
  %v2046 = vadd.f32 %v1758, %v1917
  %v2047 = vadd.f32 %v1759, %v1917
  %v2048 = vadd.f32 %v1760, %v1922
  %v2049 = vadd.f32 %v1761, %v1922
  %v2050 = vadd.f32 %v1762, %v1922
  %v2051 = vadd.f32 %v1763, %v1922
  %v2052 = vmax.f32 %v1924, 0.0
  %v2053 = vmax.f32 %v1925, 0.0
  %v2054 = vmax.f32 %v1926, 0.0
  %v2055 = vmax.f32 %v1927, 0.0
  %v2056 = vmax.f32 %v1928, 0.0
  %v2057 = vmax.f32 %v1929, 0.0
  %v2058 = vmax.f32 %v1930, 0.0
  %v2059 = vmax.f32 %v1931, 0.0
  %v2060 = vmax.f32 %v1932, 0.0
  %v2061 = vmax.f32 %v1933, 0.0
  %v2062 = vmax.f32 %v1934, 0.0
  %v2063 = vmax.f32 %v1935, 0.0
  %v2064 = vmax.f32 %v1936, 0.0
  %v2065 = vmax.f32 %v1937, 0.0
  %v2066 = vmax.f32 %v1938, 0.0
  %v2067 = vmax.f32 %v1939, 0.0
  %v2068 = vmax.f32 %v1940, 0.0
  %v2069 = vmax.f32 %v1941, 0.0
  %v2070 = vmax.f32 %v1942, 0.0
  %v2071 = vmax.f32 %v1943, 0.0
  %v2072 = vmax.f32 %v1944, 0.0
  %v2073 = vmax.f32 %v1945, 0.0
  %v2074 = vmax.f32 %v1946, 0.0
  %v2075 = vmax.f32 %v1947, 0.0
  %v2076 = vmax.f32 %v1948, 0.0
  %v2077 = vmax.f32 %v1949, 0.0
  %v2078 = vmax.f32 %v1950, 0.0
  %v2079 = vmax.f32 %v1951, 0.0
  %v2080 = vmax.f32 %v1952, 0.0
  %v2081 = vmax.f32 %v1953, 0.0
  %v2082 = vmax.f32 %v1954, 0.0
  %v2083 = vmax.f32 %v1955, 0.0
  %v2084 = vmax.f32 %v1956, 0.0
  %v2085 = vmax.f32 %v1957, 0.0
  %v2086 = vmax.f32 %v1958, 0.0
  %v2087 = vmax.f32 %v1959, 0.0
  %v2088 = vmax.f32 %v1960, 0.0
  %v2089 = vmax.f32 %v1961, 0.0
  %v2090 = vmax.f32 %v1962, 0.0
  %v2091 = vmax.f32 %v1963, 0.0
  %v2092 = vmax.f32 %v1964, 0.0
  %v2093 = vmax.f32 %v1965, 0.0
  %v2094 = vmax.f32 %v1966, 0.0
  %v2095 = vmax.f32 %v1967, 0.0
  %v2096 = vmax.f32 %v1968, 0.0
  %v2097 = vmax.f32 %v1969, 0.0
  %v2098 = vmax.f32 %v1970, 0.0
  %v2099 = vmax.f32 %v1971, 0.0
  %v2100 = vmax.f32 %v1972, 0.0
  %v2101 = vmax.f32 %v1973, 0.0
  %v2102 = vmax.f32 %v1974, 0.0
  %v2103 = vmax.f32 %v1975, 0.0
  %v2104 = vmax.f32 %v1976, 0.0
  %v2105 = vmax.f32 %v1977, 0.0
  %v2106 = vmax.f32 %v1978, 0.0
  %v2107 = vmax.f32 %v1979, 0.0
  %v2108 = vmax.f32 %v1980, 0.0
  %v2109 = vmax.f32 %v1981, 0.0
  %v2110 = vmax.f32 %v1982, 0.0
  %v2111 = vmax.f32 %v1983, 0.0
  %v2112 = vmax.f32 %v1984, 0.0
  %v2113 = vmax.f32 %v1985, 0.0
  %v2114 = vmax.f32 %v1986, 0.0
  %v2115 = vmax.f32 %v1987, 0.0
  %v2116 = vmax.f32 %v1988, 0.0
  %v2117 = vmax.f32 %v1989, 0.0
  %v2118 = vmax.f32 %v1990, 0.0
  %v2119 = vmax.f32 %v1991, 0.0
  %v2120 = vmax.f32 %v1992, 0.0
  %v2121 = vmax.f32 %v1993, 0.0
  %v2122 = vmax.f32 %v1994, 0.0
  %v2123 = vmax.f32 %v1995, 0.0
  %v2124 = vmax.f32 %v1996, 0.0
  %v2125 = vmax.f32 %v1997, 0.0
  %v2126 = vmax.f32 %v1998, 0.0
  %v2127 = vmax.f32 %v1999, 0.0
  %v2128 = vmax.f32 %v2000, 0.0
  %v2129 = vmax.f32 %v2001, 0.0
  %v2130 = vmax.f32 %v2002, 0.0
  %v2131 = vmax.f32 %v2003, 0.0
  %v2132 = vmax.f32 %v2004, 0.0
  %v2133 = vmax.f32 %v2005, 0.0
  %v2134 = vmax.f32 %v2006, 0.0
  %v2135 = vmax.f32 %v2007, 0.0
  %v2136 = vmax.f32 %v2008, 0.0
  %v2137 = vmax.f32 %v2009, 0.0
  %v2138 = vmax.f32 %v2010, 0.0
  %v2139 = vmax.f32 %v2011, 0.0
  %v2140 = vmax.f32 %v2012, 0.0
  %v2141 = vmax.f32 %v2013, 0.0
  %v2142 = vmax.f32 %v2014, 0.0
  %v2143 = vmax.f32 %v2015, 0.0
  %v2144 = vmax.f32 %v2016, 0.0
  %v2145 = vmax.f32 %v2017, 0.0
  %v2146 = vmax.f32 %v2018, 0.0
  %v2147 = vmax.f32 %v2019, 0.0
  %v2148 = vmax.f32 %v2020, 0.0
  %v2149 = vmax.f32 %v2021, 0.0
  %v2150 = vmax.f32 %v2022, 0.0
  %v2151 = vmax.f32 %v2023, 0.0
  %v2152 = vmax.f32 %v2024, 0.0
  %v2153 = vmax.f32 %v2025, 0.0
  %v2154 = vmax.f32 %v2026, 0.0
  %v2155 = vmax.f32 %v2027, 0.0
  %v2156 = vmax.f32 %v2028, 0.0
  %v2157 = vmax.f32 %v2029, 0.0
  %v2158 = vmax.f32 %v2030, 0.0
  %v2159 = vmax.f32 %v2031, 0.0
  %v2160 = vmax.f32 %v2032, 0.0
  %v2161 = vmax.f32 %v2033, 0.0
  %v2162 = vmax.f32 %v2034, 0.0
  %v2163 = vmax.f32 %v2035, 0.0
  %v2164 = vmax.f32 %v2036, 0.0
  %v2165 = vmax.f32 %v2037, 0.0
  %v2166 = vmax.f32 %v2038, 0.0
  %v2167 = vmax.f32 %v2039, 0.0
  %v2168 = vmax.f32 %v2040, 0.0
  %v2169 = vmax.f32 %v2041, 0.0
  %v2170 = vmax.f32 %v2042, 0.0
  %v2171 = vmax.f32 %v2043, 0.0
  %v2172 = vmax.f32 %v2044, 0.0
  %v2173 = vmax.f32 %v2045, 0.0
  %v2174 = vmax.f32 %v2046, 0.0
  %v2175 = vmax.f32 %v2047, 0.0
  %v2176 = vmax.f32 %v2048, 0.0
  %v2177 = vmax.f32 %v2049, 0.0
  %v2178 = vmax.f32 %v2050, 0.0
  %v2179 = vmax.f32 %v2051, 0.0
  %v2180 = vpack.c.bf16 %v2056, %v2052
  %v2181 = vpack.c.bf16 %v2057, %v2053
  %v2182 = vpack.c.bf16 %v2058, %v2054
  %v2183 = vpack.c.bf16 %v2059, %v2055
  %v2184 = vpack.c.bf16 %v2064, %v2060
  %v2185 = vpack.c.bf16 %v2065, %v2061
  %v2186 = vpack.c.bf16 %v2066, %v2062
  %v2187 = vpack.c.bf16 %v2067, %v2063
  %v2188 = vpack.c.bf16 %v2072, %v2068
  %v2189 = vpack.c.bf16 %v2073, %v2069
  %v2190 = vpack.c.bf16 %v2074, %v2070
  %v2191 = vpack.c.bf16 %v2075, %v2071
  %v2192 = vpack.c.bf16 %v2080, %v2076
  %v2193 = vpack.c.bf16 %v2081, %v2077
  %v2194 = vpack.c.bf16 %v2082, %v2078
  %v2195 = vpack.c.bf16 %v2083, %v2079
  %v2196 = vpack.c.bf16 %v2088, %v2084
  %v2197 = vpack.c.bf16 %v2089, %v2085
  %v2198 = vpack.c.bf16 %v2090, %v2086
  %v2199 = vpack.c.bf16 %v2091, %v2087
  %v2200 = vpack.c.bf16 %v2096, %v2092
  %v2201 = vpack.c.bf16 %v2097, %v2093
  %v2202 = vpack.c.bf16 %v2098, %v2094
  %v2203 = vpack.c.bf16 %v2099, %v2095
  %v2204 = vpack.c.bf16 %v2104, %v2100
  %v2205 = vpack.c.bf16 %v2105, %v2101
  %v2206 = vpack.c.bf16 %v2106, %v2102
  %v2207 = vpack.c.bf16 %v2107, %v2103
  %v2208 = vpack.c.bf16 %v2112, %v2108
  %v2209 = vpack.c.bf16 %v2113, %v2109
  %v2210 = vpack.c.bf16 %v2114, %v2110
  %v2211 = vpack.c.bf16 %v2115, %v2111
  %v2212 = vpack.c.bf16 %v2120, %v2116
  %v2213 = vpack.c.bf16 %v2121, %v2117
  %v2214 = vpack.c.bf16 %v2122, %v2118
  %v2215 = vpack.c.bf16 %v2123, %v2119
  %v2216 = vpack.c.bf16 %v2128, %v2124
  %v2217 = vpack.c.bf16 %v2129, %v2125
  %v2218 = vpack.c.bf16 %v2130, %v2126
  %v2219 = vpack.c.bf16 %v2131, %v2127
  %v2220 = vpack.c.bf16 %v2136, %v2132
  %v2221 = vpack.c.bf16 %v2137, %v2133
  %v2222 = vpack.c.bf16 %v2138, %v2134
  %v2223 = vpack.c.bf16 %v2139, %v2135
  %v2224 = vpack.c.bf16 %v2144, %v2140
  %v2225 = vpack.c.bf16 %v2145, %v2141
  %v2226 = vpack.c.bf16 %v2146, %v2142
  %v2227 = vpack.c.bf16 %v2147, %v2143
  %v2228 = vpack.c.bf16 %v2152, %v2148
  %v2229 = vpack.c.bf16 %v2153, %v2149
  %v2230 = vpack.c.bf16 %v2154, %v2150
  %v2231 = vpack.c.bf16 %v2155, %v2151
  %v2232 = vpack.c.bf16 %v2160, %v2156
  %v2233 = vpack.c.bf16 %v2161, %v2157
  %v2234 = vpack.c.bf16 %v2162, %v2158
  %v2235 = vpack.c.bf16 %v2163, %v2159
  %v2236 = vpack.c.bf16 %v2168, %v2164
  %v2237 = vpack.c.bf16 %v2169, %v2165
  %v2238 = vpack.c.bf16 %v2170, %v2166
  %v2239 = vpack.c.bf16 %v2171, %v2167
  %v2240 = vpack.c.bf16 %v2176, %v2172
  %v2241 = vpack.c.bf16 %v2177, %v2173
  %v2242 = vpack.c.bf16 %v2178, %v2174
  %v2243 = vpack.c.bf16 %v2179, %v2175
  %v2244 = vld [vmem:[%s4] sm:$0xff]
  %v2245 = vld [vmem:[%s5] sm:$0xff]
  %2247 = vset.pattern.permute.xlu0 0
  %2248 = vperm.xlu0 %2247, %v2245
  %v2249 = vpop.permute.xlu0 %2248
  %v2252 = vunpack.c.l.b16 %v2244
  %v2253 = vunpack.c.h.b16 %v2244
  %v2254 = vpack.c.b16 %v2252, %v2252
  %v2255 = vpack.c.b16 %v2253, %v2253
  %2258 = vmatprep.subr.bf16.mxu0 %v2209
  %2259 = vmatpush1.bf16.msra.mxu0 %v2208
  %2260 = vmatprep.subr.bf16.mxu0 %v2205
  %2261 = vmatpush1.bf16.msra.mxu0 %v2204
  %2262 = vmatprep.subr.bf16.mxu0 %v2201
  %2263 = vmatpush1.bf16.msra.mxu0 %v2200
  %2264 = vmatprep.subr.bf16.mxu0 %v2197
  %2265 = vmatpush1.bf16.msra.mxu0 %v2196
  %2266 = vmatprep.subr.bf16.mxu0 %v2193
  %2267 = vmatpush1.bf16.msra.mxu0 %v2192
  %2268 = vmatprep.subr.bf16.mxu0 %v2189
  %2269 = vmatpush1.bf16.msra.mxu0 %v2188
  %2270 = vmatprep.subr.bf16.mxu0 %v2185
  %2271 = vmatpush1.bf16.msra.mxu0 %v2184
  %2272 = vmatprep.subr.bf16.mxu0 %v2181
  %2273 = vmatpush1.bf16.msra.mxu0 %v2180
  %2274 = vmatprep.subr.bf16.mxu0 %v2241
  %2275 = vmatpush2.bf16.msra.mxu0 %v2240
  %2276 = vmatprep.subr.bf16.mxu0 %v2237
  %2277 = vmatpush2.bf16.msra.mxu0 %v2236
  %2278 = vmatprep.subr.bf16.mxu0 %v2233
  %2279 = vmatpush2.bf16.msra.mxu0 %v2232
  %2280 = vmatprep.subr.bf16.mxu0 %v2229
  %2281 = vmatpush2.bf16.msra.mxu0 %v2228
  %2282 = vmatprep.subr.bf16.mxu0 %v2225
  %2283 = vmatpush2.bf16.msra.mxu0 %v2224
  %2284 = vmatprep.subr.bf16.mxu0 %v2221
  %2285 = vmatpush2.bf16.msra.mxu0 %v2220
  %2286 = vmatprep.subr.bf16.mxu0 %v2217
  %2287 = vmatpush2.bf16.msra.mxu0 %v2216
  %2288 = vmatprep.subr.bf16.mxu0 %v2213
  %2289 = vmatpush2.bf16.msra.mxu0 %v2212
  %2290 = vmatprep.mubr.bf16.mxu0 %v2255
  %2291 = vmatmul.mubr.bf16.gmra.mxu0 %v2254
  %v2292 = vpop.f32.mrf.mxu0
  %v2293 = vadd.f32 %v2249, %v2292
  %v2294 = vpop.f32.mrf.mxu0
  %v2295 = vadd.f32 %v2249, %v2294
  %v2296 = vpop.f32.mrf.mxu0
  %v2297 = vpop.f32.mrf.mxu0
  %2298 = vdwg.mxu0
  %2299 = vmatprep.subr.bf16.mxu0 %v2211
  %2300 = vmatpush1.bf16.msra.mxu0 %v2210
  %2301 = vmatprep.subr.bf16.mxu0 %v2207
  %2302 = vmatpush1.bf16.msra.mxu0 %v2206
  %2303 = vmatprep.subr.bf16.mxu0 %v2203
  %2304 = vmatpush1.bf16.msra.mxu0 %v2202
  %2305 = vmatprep.subr.bf16.mxu0 %v2199
  %2306 = vmatpush1.bf16.msra.mxu0 %v2198
  %2307 = vmatprep.subr.bf16.mxu0 %v2195
  %2308 = vmatpush1.bf16.msra.mxu0 %v2194
  %2309 = vmatprep.subr.bf16.mxu0 %v2191
  %2310 = vmatpush1.bf16.msra.mxu0 %v2190
  %2311 = vmatprep.subr.bf16.mxu0 %v2187
  %2312 = vmatpush1.bf16.msra.mxu0 %v2186
  %2313 = vmatprep.subr.bf16.mxu0 %v2183
  %2314 = vmatpush1.bf16.msra.mxu0 %v2182
  %2315 = vmatprep.subr.bf16.mxu0 %v2243
  %2316 = vmatpush2.bf16.msra.mxu0 %v2242
  %2317 = vmatprep.subr.bf16.mxu0 %v2239
  %2318 = vmatpush2.bf16.msra.mxu0 %v2238
  %2319 = vmatprep.subr.bf16.mxu0 %v2235
  %2320 = vmatpush2.bf16.msra.mxu0 %v2234
  %2321 = vmatprep.subr.bf16.mxu0 %v2231
  %2322 = vmatpush2.bf16.msra.mxu0 %v2230
  %2323 = vmatprep.subr.bf16.mxu0 %v2227
  %2324 = vmatpush2.bf16.msra.mxu0 %v2226
  %2325 = vmatprep.subr.bf16.mxu0 %v2223
  %2326 = vmatpush2.bf16.msra.mxu0 %v2222
  %2327 = vmatprep.subr.bf16.mxu0 %v2219
  %2328 = vmatpush2.bf16.msra.mxu0 %v2218
  %2329 = vmatprep.subr.bf16.mxu0 %v2215
  %2330 = vmatpush2.bf16.msra.mxu0 %v2214
  %2331 = vmatprep.mubr.bf16.mxu0 %v2255
  %2332 = vmatmul.mubr.bf16.gmra.mxu0 %v2254
  %v2333 = vpop.f32.mrf.mxu0
  %v2334 = vadd.f32 %v2249, %v2333
  %v2335 = vpop.f32.mrf.mxu0
  %v2336 = vadd.f32 %v2249, %v2335
  %v2337 = vpop.f32.mrf.mxu0
  %v2338 = vpop.f32.mrf.mxu0
  %2339 = vdwg.mxu0
  %2340 = vst [vmem:[%s6] sm:$0xff] %v2293
  %2341 = vst [vmem:[%s6 + $0x8] sm:$0xff] %v2295
  %s2342 = scalar_lea.vmem %s6, 16
  %2343 = vst [vmem:[%s2342] sm:$0xff] %v2334
  %2344 = vst [vmem:[%s2342 + $0x8] sm:$0xff] %v2336
  // Predicated region
  $region26: #{segmentation_decoder.1} parent=0 // pred_check
    _
  $region27: #{segmentation_decoder.1} parent=0 // pred_check_branch
    %2346 = sbr.rel (0) target = $region29
  $region28: #{segmentation_decoder.1} parent=0 // pred_region
    _
  $region29: #{segmentation_decoder.1} parent=0 // pred_fallthru
    _
  // Predicated region
  $region30: #{segmentation_decoder.1} parent=0 // pred_check
    _
  $region31: #{segmentation_decoder.1} parent=0 // pred_check_branch
    %2348 = sbr.rel (0) target = $region33
  $region32: #{segmentation_decoder.1} parent=0 // pred_region
    _
  $region33: #{segmentation_decoder.1} parent=0 // pred_fallthru
    _

</llo_original>
